<compile_context>
chip_gen: v5e
topology: v5e:2x2
jax: 0.10.0
libtpu: 0.0.40
codegen_flags: <defaults>
</compile_context>

<pallas_src>
import functools

import jax
import jax.numpy as jnp
from jax.experimental import pallas as pl
from jax.experimental.pallas import tpu as pltpu

# ---- Mapping hyper-parameters (small, consistent with the module) ----------
EMBED = 32          # embed_size (== hidden_size of the "CLIP" encoder)
HEADS = 4           # n_heads
HEAD_DIM = EMBED // HEADS
EXPANSION = 2       # forward_expansion
FFN = EMBED * EXPANSION
EP_LEN = 4          # ep_len
NUM_LAYERS = 2      # num_layers
LN_EPS = 1e-5

# bias / LN slab: [L, 8, 128], one vector per sublane row (lane start always 0)
_ROW_BQKV, _ROW_BO, _ROW_B1, _ROW_B2 = 0, 1, 2, 3
_ROW_G1, _ROW_BE1, _ROW_G2, _ROW_BE2 = 4, 5, 6, 7
_BIAS_ROWS, _BIAS_LANES = 8, 128


def _layer_norm(h, gamma, beta):
    mu = jnp.mean(h, axis=-1, keepdims=True)
    var = jnp.mean((h - mu) * (h - mu), axis=-1, keepdims=True)
    return (h - mu) * jax.lax.rsqrt(var + LN_EPS) * gamma + beta


# ---------------------------------------------------------------------------
# Fused Pallas kernel: full transformer-encoder stack + mapper, one sequence
# per grid step (whole parameter set stays resident in VMEM across the grid).
# ---------------------------------------------------------------------------
def _mapping_kernel(x_ref, wqkv_ref, wo_ref, w1_ref, w2_ref, bias_ref,
                    wm_ref, bm_ref, out_ref):
    """x_ref: [S, E]          wqkv_ref: [L, E, 3E]   wo_ref: [L, E, E]
    w1_ref: [L, E, FFN]       w2_ref: [L, FFN, E]    bias_ref: [L, 8, 128]
    wm_ref: [E, EP_LEN*E]     bm_ref: [1, EP_LEN*E]  out_ref: [S, EP_LEN*E]"""
    S = x_ref.shape[0]
    x = x_ref[...].astype(jnp.float32)

    for l in range(NUM_LAYERS):                      # static loop over layers
        wqkv = wqkv_ref[l]                           # [E, 3E]  (q-scale folded)
        wo = wo_ref[l]                               # [E, E]
        w1 = w1_ref[l]                               # [E, FFN]
        w2 = w2_ref[l]                               # [FFN, E]
        b = bias_ref[l]                              # [8, 128] sublane-indexed

        bqkv = b[_ROW_BQKV:_ROW_BQKV + 1, 0:3 * EMBED]
        bo = b[_ROW_BO:_ROW_BO + 1, 0:EMBED]
        b1 = b[_ROW_B1:_ROW_B1 + 1, 0:FFN]
        b2 = b[_ROW_B2:_ROW_B2 + 1, 0:EMBED]
        g1 = b[_ROW_G1:_ROW_G1 + 1, 0:EMBED]
        be1 = b[_ROW_BE1:_ROW_BE1 + 1, 0:EMBED]
        g2 = b[_ROW_G2:_ROW_G2 + 1, 0:EMBED]
        be2 = b[_ROW_BE2:_ROW_BE2 + 1, 0:EMBED]

        # ---- multi-head self-attention: one fused QKV matmul ---------------
        qkv = jnp.dot(x, wqkv, preferred_element_type=jnp.float32) + bqkv
        q = qkv[:, 0:EMBED]                          # already pre-scaled
        k = qkv[:, EMBED:2 * EMBED]
        v = qkv[:, 2 * EMBED:3 * EMBED]

        kT = k.T                                     # single XLU transpose/layer
        s_blocks = []
        for h in range(HEADS):                       # static loop over heads
            lo = h * HEAD_DIM
            hi = lo + HEAD_DIM
            s_blocks.append(jnp.dot(q[:, lo:hi], kT[lo:hi, :],
                                    preferred_element_type=jnp.float32))
        # one lane-dense slab [H*S, S]: each row is one (head, query) pair, so
        # the lane reduce below IS the per-head softmax (single segmented pass)
        s_all = jnp.concatenate(s_blocks, axis=0)
        s_all = s_all - jnp.max(s_all, axis=-1, keepdims=True)
        p_all = jnp.exp(s_all)
        p_all = p_all * pl.reciprocal(jnp.sum(p_all, axis=-1, keepdims=True),
                                      approx=True)
        ctx = jnp.concatenate(
            [jnp.dot(p_all[h * S:(h + 1) * S, :],
                     v[:, h * HEAD_DIM:(h + 1) * HEAD_DIM],
                     preferred_element_type=jnp.float32)
             for h in range(HEADS)], axis=-1)        # [S, E]
        attn = jnp.dot(ctx, wo, preferred_element_type=jnp.float32) + bo

        # ---- residual + LayerNorm 1 (post-LN) ------------------------------
        h1 = _layer_norm(x + attn, g1, be1)

        # ---- feed-forward (relu); dropout -> identity (eval) ----------------
        f = jnp.dot(h1, w1, preferred_element_type=jnp.float32) + b1
        f = jnp.maximum(f, 0.0)
        f = jnp.dot(f, w2, preferred_element_type=jnp.float32) + b2

        # ---- residual + LayerNorm 2 ----------------------------------------
        x = _layer_norm(h1 + f, g2, be2)

    # ---- final mapper: Linear(E, ep_len*E) -> lane-dense [S, 128] store ----
    out_ref[...] = (jnp.dot(x, wm_ref[...], preferred_element_type=jnp.float32)
                    + bm_ref[...]).astype(out_ref.dtype)


# ---------------------------------------------------------------------------
# pallas_call wrapper: grid over independent sequences (parallel semantics so
# v7x's two TensorCores split the batch); whole params as resident VMEM blocks
# ---------------------------------------------------------------------------
def _mapping_pallas(x3, params):
    N, S, _ = x3.shape

    # advisory cost estimate so XLA overlaps this tiny call with other HLO
    flops_layer = (2 * S * EMBED * 3 * EMBED          # fused QKV
                   + 2 * S * S * EMBED                # scores (all heads)
                   + 2 * S * S * EMBED                # probs @ V
                   + 2 * S * EMBED * EMBED            # output projection
                   + 4 * S * EMBED * FFN)             # FFN up + down
    flops = N * (NUM_LAYERS * flops_layer + 2 * S * EMBED * EP_LEN * EMBED)
    transcendentals = N * NUM_LAYERS * (HEADS * S * S + HEADS * S + 2 * S)
    param_bytes = 4 * (NUM_LAYERS * (EMBED * 3 * EMBED + EMBED * EMBED
                                     + EMBED * FFN + FFN * EMBED
                                     + _BIAS_ROWS * _BIAS_LANES)
                       + EMBED * EP_LEN * EMBED + EP_LEN * EMBED)
    bytes_accessed = param_bytes + 4 * N * S * (EMBED + EP_LEN * EMBED)

    full3 = lambda shape: pl.BlockSpec(shape, lambda n: (0, 0, 0))
    full2 = lambda shape: pl.BlockSpec(shape, lambda n: (0, 0))

    return pl.pallas_call(
        _mapping_kernel,
        out_shape=jax.ShapeDtypeStruct((N, S, EP_LEN * EMBED), jnp.float32),
        grid=(N,),
        in_specs=[
            pl.BlockSpec((None, S, EMBED), lambda n: (n, 0, 0)),   # x
            full3(params["wqkv"].shape),                            # [L,E,3E]
            full3(params["wo"].shape),                              # [L,E,E]
            full3(params["w1"].shape),                              # [L,E,FFN]
            full3(params["w2"].shape),                              # [L,FFN,E]
            full3(params["biases"].shape),                          # [L,8,128]
            full2(params["wm"].shape),                              # [E,128]
            full2(params["bm"].shape),                              # [1,128]
        ],
        out_specs=pl.BlockSpec((None, S, EP_LEN * EMBED), lambda n: (n, 0, 0)),
        compiler_params=pltpu.CompilerParams(
            dimension_semantics=("parallel",)),
        cost_estimate=pl.CostEstimate(flops=int(flops),
                                      transcendentals=int(transcendentals),
                                      bytes_accessed=int(bytes_accessed)),
    )(x3, params["wqkv"], params["wo"], params["w1"], params["w2"],
      params["biases"], params["wm"], params["bm"])


@functools.partial(jax.jit, static_argnames=("train_mode",))
def mapping_forward(img_embedded, params, train_mode=False):
    """Mapping.forward: transformer encoder stack + mapper + view.

    2-D input [S, E] is ONE sequence whose rows attend to each other (faithful
    to the PyTorch 2-D-input quirk of both the inference [1,E] and train [B,E]
    paths).  3-D input [N, S, E] is N independent sequences processed in
    parallel grid steps (no cross-sequence attention)."""
    x = img_embedded.astype(jnp.float32)
    x3 = x[None] if x.ndim == 2 else x
    y = _mapping_pallas(x3, params)                   # [N, S, ep_len*E]
    if train_mode:
        return y.reshape(-1, EP_LEN, EMBED)
    return y.reshape(EP_LEN, EMBED)


# ---------------------------------------------------------------------------
# deterministic parameter initialization (Mapping.init_weights analogue),
# packed directly into the kernel's tile-aligned layout
# ---------------------------------------------------------------------------
def _kaiming(key, fan_in, shape):
    # kaiming_normal_(mode='fan_in', nonlinearity='relu') -> std = sqrt(2/fan_in)
    return (jax.random.normal(key, shape, jnp.float32)
            * jnp.sqrt(2.0 / fan_in)).astype(jnp.float32)


def init_params(key):
    inv_sqrt_d = jnp.float32(1.0 / (HEAD_DIM ** 0.5))
    wqkv_l, wo_l, w1_l, w2_l, bias_l = [], [], [], [], []
    for _ in range(NUM_LAYERS):
        keys = jax.random.split(key, 7)
        key = keys[0]
        # projections stored as [in, out]; softmax scale folded into Wq.
        # NOTE: if nonzero pretrained q-biases are ever packed into this
        # layout, they must be scaled by inv_sqrt_d as well (zeros here).
        wq = _kaiming(keys[1], EMBED, (EMBED, EMBED)) * inv_sqrt_d
        wk = _kaiming(keys[2], EMBED, (EMBED, EMBED))
        wv = _kaiming(keys[3], EMBED, (EMBED, EMBED))
        wo = _kaiming(keys[4], EMBED, (EMBED, EMBED))
        w1 = _kaiming(keys[5], EMBED, (EMBED, FFN))
        w2 = _kaiming(keys[6], FFN, (FFN, EMBED))

        wqkv_l.append(jnp.concatenate([wq, wk, wv], axis=1))   # [32, 96]
        wo_l.append(wo)                                        # [32, 32]
        w1_l.append(w1)                                        # [32, 64]
        w2_l.append(w2)                                        # [64, 32]

        # biases zero (init_weights), LN gamma=1 / beta=0; one vector per
        # sublane row, padded to 128 lanes.
        brow = jnp.zeros((_BIAS_ROWS, _BIAS_LANES), jnp.float32)
        brow = brow.at[_ROW_G1, :EMBED].set(1.0)
        brow = brow.at[_ROW_G2, :EMBED].set(1.0)
        bias_l.append(brow)

    km, _ = jax.random.split(key)
    return {
        "wqkv": jnp.stack(wqkv_l),                    # [L, 32, 96]
        "wo": jnp.stack(wo_l),                        # [L, 32, 32]
        "w1": jnp.stack(w1_l),                        # [L, 32, 64]
        "w2": jnp.stack(w2_l),                        # [L, 64, 32]
        "biases": jnp.stack(bias_l),                  # [L, 8, 128]
        "wm": _kaiming(km, EMBED, (EMBED, EP_LEN * EMBED)),   # [32, 128]
        "bm": jnp.zeros((1, EP_LEN * EMBED), jnp.float32),    # [1, 128]
    }


# ---------------------------------------------------------------------------
# pure-JAX reference of the same math (exact softmax divide) for verification
# ---------------------------------------------------------------------------
def _mapping_reference(x, params):
    x = x.astype(jnp.float32)
    for l in range(NUM_LAYERS):
        wqkv, wo = params["wqkv"][l], params["wo"][l]
        w1, w2 = params["w1"][l], params["w2"][l]
        b = params["biases"][l]
        bqkv, bo = b[_ROW_BQKV, :3 * EMBED], b[_ROW_BO, :EMBED]
        b1, b2 = b[_ROW_B1, :FFN], b[_ROW_B2, :EMBED]
        g1, be1 = b[_ROW_G1, :EMBED], b[_ROW_BE1, :EMBED]
        g2, be2 = b[_ROW_G2, :EMBED], b[_ROW_BE2, :EMBED]

        qkv = x @ wqkv + bqkv
        q, k, v = (qkv[:, :EMBED], qkv[:, EMBED:2 * EMBED],
                   qkv[:, 2 * EMBED:])
        heads = []
        for h in range(HEADS):
            lo, hi = h * HEAD_DIM, (h + 1) * HEAD_DIM
            p = jax.nn.softmax(q[:, lo:hi] @ k[:, lo:hi].T, axis=-1)
            heads.append(p @ v[:, lo:hi])
        attn = jnp.concatenate(heads, axis=-1) @ wo + bo
        h1 = _layer_norm(x + attn, g1, be1)
        f = jnp.maximum(h1 @ w1 + b1, 0.0) @ w2 + b2
        x = _layer_norm(h1 + f, g2, be2)
    return x @ params["wm"] + params["bm"]


# ---------------------------------------------------------------------------
if __name__ == "__main__":
    root = jax.random.PRNGKey(0)
    k_param, k_train, k_infer, k_batch = jax.random.split(root, 4)

    params = init_params(k_param)

    # train_mode path of Net.train_forward: img_emb [B, E] -> [B, ep_len, E]
    img_emb_train = jax.random.normal(k_train, (8, EMBED), jnp.float32)
    out_train = mapping_forward(img_emb_train, params, train_mode=True)
    jax.block_until_ready(out_train)
    assert out_train.shape == (8, EP_LEN, EMBED), out_train.shape

    # inference path of Net.forward: pooler output [1, E] -> [ep_len, E]
    img_emb_infer = jax.random.normal(k_infer, (1, EMBED), jnp.float32)
    out_infer = mapping_forward(img_emb_infer, params, train_mode=False)
    jax.block_until_ready(out_infer)
    assert out_infer.shape == (EP_LEN, EMBED), out_infer.shape

    # batched independent sequences: parallel grid (2 TCs split it on v7x)
    img_emb_batch = jax.random.normal(k_batch, (4, 8, EMBED), jnp.float32)
    out_batch = mapping_forward(img_emb_batch, params, train_mode=True)
    jax.block_until_ready(out_batch)
    assert out_batch.shape == (4 * 8, EP_LEN, EMBED), out_batch.shape

    # numerical check vs pure-JAX reference (loose: approx EUP reciprocal)
    ref_train = _mapping_reference(img_emb_train, params)
    assert jnp.allclose(out_train.reshape(8, EP_LEN * EMBED), ref_train,
                        rtol=5e-2, atol=5e-2), "kernel/reference mismatch"
    ref_infer = _mapping_reference(img_emb_infer, params)
    assert jnp.allclose(out_infer.reshape(1, EP_LEN * EMBED), ref_infer,
                        rtol=5e-2, atol=5e-2), "kernel/reference mismatch"

    assert bool(jnp.all(jnp.isfinite(out_train)))
    assert bool(jnp.all(jnp.isfinite(out_infer)))
    assert bool(jnp.all(jnp.isfinite(out_batch)))
    print("KERNEL_OK")
</pallas_src>

<mosaic_0001>
module attributes {stable_mosaic.version = 11 : i64} {
  func.func @_mapping_kernel(%arg0: i32, %arg1: memref<1x8x32xf32, #tpu.memory_space<vmem>>, %arg2: memref<2x32x96xf32, #tpu.memory_space<vmem>>, %arg3: memref<2x32x32xf32, #tpu.memory_space<vmem>>, %arg4: memref<2x32x64xf32, #tpu.memory_space<vmem>>, %arg5: memref<2x64x32xf32, #tpu.memory_space<vmem>>, %arg6: memref<2x8x128xf32, #tpu.memory_space<vmem>>, %arg7: memref<32x128xf32, #tpu.memory_space<vmem>>, %arg8: memref<1x128xf32, #tpu.memory_space<vmem>>, %arg9: memref<1x8x128xf32, #tpu.memory_space<vmem>>) attributes {dimension_semantics = [#tpu.dimension_semantics<parallel>], iteration_bounds = array<i64: 1>, scalar_prefetch = 0 : i64, scratch_operands = 0 : i64, tpu.core_type = #tpu.core_type<tc>, window_params = [{transform_indices = @transform_0, window_bounds = array<i64: 1, 8, 32>}, {pipeline_mode = #tpu.pipeline_mode<synchronous>, transform_indices = @transform_1, window_bounds = array<i64: 2, 32, 96>}, {pipeline_mode = #tpu.pipeline_mode<synchronous>, transform_indices = @transform_2, window_bounds = array<i64: 2, 32, 32>}, {pipeline_mode = #tpu.pipeline_mode<synchronous>, transform_indices = @transform_3, window_bounds = array<i64: 2, 32, 64>}, {pipeline_mode = #tpu.pipeline_mode<synchronous>, transform_indices = @transform_4, window_bounds = array<i64: 2, 64, 32>}, {pipeline_mode = #tpu.pipeline_mode<synchronous>, transform_indices = @transform_5, window_bounds = array<i64: 2, 8, 128>}, {pipeline_mode = #tpu.pipeline_mode<synchronous>, transform_indices = @transform_6, window_bounds = array<i64: 32, 128>}, {pipeline_mode = #tpu.pipeline_mode<synchronous>, transform_indices = @transform_7, window_bounds = array<i64: 1, 128>}, {transform_indices = @transform_8, window_bounds = array<i64: 1, 8, 128>}]} {
    %c0 = arith.constant 0 : index
    %c0_0 = arith.constant 0 : index
    %c0_1 = arith.constant 0 : index
    %0 = vector.load %arg1[%c0, %c0_0, %c0_1] : memref<1x8x32xf32, #tpu.memory_space<vmem>>, vector<1x8x32xf32>
    %1 = vector.shape_cast %0 : vector<1x8x32xf32> to vector<8x32xf32>
    %c0_2 = arith.constant 0 : index
    %c0_3 = arith.constant 0 : index
    %c0_4 = arith.constant 0 : index
    %2 = vector.load %arg2[%c0_2, %c0_3, %c0_4] : memref<2x32x96xf32, #tpu.memory_space<vmem>>, vector<1x32x96xf32>
    %3 = vector.shape_cast %2 : vector<1x32x96xf32> to vector<32x96xf32>
    %c0_5 = arith.constant 0 : index
    %c0_6 = arith.constant 0 : index
    %c0_7 = arith.constant 0 : index
    %4 = vector.load %arg3[%c0_5, %c0_6, %c0_7] : memref<2x32x32xf32, #tpu.memory_space<vmem>>, vector<1x32x32xf32>
    %5 = vector.shape_cast %4 : vector<1x32x32xf32> to vector<32x32xf32>
    %c0_8 = arith.constant 0 : index
    %c0_9 = arith.constant 0 : index
    %c0_10 = arith.constant 0 : index
    %6 = vector.load %arg4[%c0_8, %c0_9, %c0_10] : memref<2x32x64xf32, #tpu.memory_space<vmem>>, vector<1x32x64xf32>
    %7 = vector.shape_cast %6 : vector<1x32x64xf32> to vector<32x64xf32>
    %c0_11 = arith.constant 0 : index
    %c0_12 = arith.constant 0 : index
    %c0_13 = arith.constant 0 : index
    %8 = vector.load %arg5[%c0_11, %c0_12, %c0_13] : memref<2x64x32xf32, #tpu.memory_space<vmem>>, vector<1x64x32xf32>
    %9 = vector.shape_cast %8 : vector<1x64x32xf32> to vector<64x32xf32>
    %c0_14 = arith.constant 0 : index
    %c0_15 = arith.constant 0 : index
    %c0_16 = arith.constant 0 : index
    %10 = vector.load %arg6[%c0_14, %c0_15, %c0_16] : memref<2x8x128xf32, #tpu.memory_space<vmem>>, vector<1x8x128xf32>
    %11 = vector.shape_cast %10 : vector<1x8x128xf32> to vector<8x128xf32>
    %12 = vector.extract_strided_slice %11 {offsets = [0, 0], sizes = [1, 96], strides = [1, 1]} : vector<8x128xf32> to vector<1x96xf32>
    %13 = vector.extract_strided_slice %11 {offsets = [1, 0], sizes = [1, 32], strides = [1, 1]} : vector<8x128xf32> to vector<1x32xf32>
    %14 = vector.extract_strided_slice %11 {offsets = [2, 0], sizes = [1, 64], strides = [1, 1]} : vector<8x128xf32> to vector<1x64xf32>
    %15 = vector.extract_strided_slice %11 {offsets = [3, 0], sizes = [1, 32], strides = [1, 1]} : vector<8x128xf32> to vector<1x32xf32>
    %16 = vector.extract_strided_slice %11 {offsets = [4, 0], sizes = [1, 32], strides = [1, 1]} : vector<8x128xf32> to vector<1x32xf32>
    %17 = vector.extract_strided_slice %11 {offsets = [5, 0], sizes = [1, 32], strides = [1, 1]} : vector<8x128xf32> to vector<1x32xf32>
    %18 = vector.extract_strided_slice %11 {offsets = [6, 0], sizes = [1, 32], strides = [1, 1]} : vector<8x128xf32> to vector<1x32xf32>
    %19 = vector.extract_strided_slice %11 {offsets = [7, 0], sizes = [1, 32], strides = [1, 1]} : vector<8x128xf32> to vector<1x32xf32>
    %cst = arith.constant dense<0.000000e+00> : vector<8x96xf32>
    %20 = tpu.matmul %1, %3, %cst {dimension_numbers = #tpu.dot_dimension_numbers<[1], [0], [0], [1], [0, 0, 1, 1], [], []>} : vector<8x32xf32>, vector<32x96xf32>, vector<8x96xf32> -> vector<8x96xf32>
    %21 = vector.broadcast %12 : vector<1x96xf32> to vector<8x96xf32>
    %22 = arith.addf %20, %21 : vector<8x96xf32>
    %23 = vector.extract_strided_slice %22 {offsets = [0, 0], sizes = [8, 32], strides = [1, 1]} : vector<8x96xf32> to vector<8x32xf32>
    %24 = vector.extract_strided_slice %22 {offsets = [0, 32], sizes = [8, 32], strides = [1, 1]} : vector<8x96xf32> to vector<8x32xf32>
    %25 = vector.extract_strided_slice %22 {offsets = [0, 64], sizes = [8, 32], strides = [1, 1]} : vector<8x96xf32> to vector<8x32xf32>
    %26 = tpu.transpose %24, [1, 0] : vector<8x32xf32> -> vector<32x8xf32>
    %27 = vector.extract_strided_slice %23 {offsets = [0, 0], sizes = [8, 8], strides = [1, 1]} : vector<8x32xf32> to vector<8x8xf32>
    %28 = vector.extract_strided_slice %26 {offsets = [0, 0], sizes = [8, 8], strides = [1, 1]} : vector<32x8xf32> to vector<8x8xf32>
    %cst_17 = arith.constant dense<0.000000e+00> : vector<8x8xf32>
    %29 = tpu.matmul %27, %28, %cst_17 {dimension_numbers = #tpu.dot_dimension_numbers<[1], [0], [0], [1], [0, 0, 1, 1], [], []>} : vector<8x8xf32>, vector<8x8xf32>, vector<8x8xf32> -> vector<8x8xf32>
    %30 = vector.extract_strided_slice %23 {offsets = [0, 8], sizes = [8, 8], strides = [1, 1]} : vector<8x32xf32> to vector<8x8xf32>
    %31 = vector.extract_strided_slice %26 {offsets = [8, 0], sizes = [8, 8], strides = [1, 1]} : vector<32x8xf32> to vector<8x8xf32>
    %cst_18 = arith.constant dense<0.000000e+00> : vector<8x8xf32>
    %32 = tpu.matmul %30, %31, %cst_18 {dimension_numbers = #tpu.dot_dimension_numbers<[1], [0], [0], [1], [0, 0, 1, 1], [], []>} : vector<8x8xf32>, vector<8x8xf32>, vector<8x8xf32> -> vector<8x8xf32>
    %33 = vector.extract_strided_slice %23 {offsets = [0, 16], sizes = [8, 8], strides = [1, 1]} : vector<8x32xf32> to vector<8x8xf32>
    %34 = vector.extract_strided_slice %26 {offsets = [16, 0], sizes = [8, 8], strides = [1, 1]} : vector<32x8xf32> to vector<8x8xf32>
    %cst_19 = arith.constant dense<0.000000e+00> : vector<8x8xf32>
    %35 = tpu.matmul %33, %34, %cst_19 {dimension_numbers = #tpu.dot_dimension_numbers<[1], [0], [0], [1], [0, 0, 1, 1], [], []>} : vector<8x8xf32>, vector<8x8xf32>, vector<8x8xf32> -> vector<8x8xf32>
    %36 = vector.extract_strided_slice %23 {offsets = [0, 24], sizes = [8, 8], strides = [1, 1]} : vector<8x32xf32> to vector<8x8xf32>
    %37 = vector.extract_strided_slice %26 {offsets = [24, 0], sizes = [8, 8], strides = [1, 1]} : vector<32x8xf32> to vector<8x8xf32>
    %cst_20 = arith.constant dense<0.000000e+00> : vector<8x8xf32>
    %38 = tpu.matmul %36, %37, %cst_20 {dimension_numbers = #tpu.dot_dimension_numbers<[1], [0], [0], [1], [0, 0, 1, 1], [], []>} : vector<8x8xf32>, vector<8x8xf32>, vector<8x8xf32> -> vector<8x8xf32>
    %39 = tpu.concatenate %29, %32, %35, %38 in 0 : vector<8x8xf32>, vector<8x8xf32>, vector<8x8xf32>, vector<8x8xf32> -> vector<32x8xf32>
    %cst_21 = arith.constant dense<0xFF800000> : vector<32xf32>
    %40 = vector.multi_reduction <maximumf>, %39, %cst_21 [1] : vector<32x8xf32> to vector<32xf32>
    %41 = vector.shape_cast %40 : vector<32xf32> to vector<32x1xf32>
    %42 = vector.broadcast %41 : vector<32x1xf32> to vector<32x8xf32>
    %43 = arith.subf %39, %42 : vector<32x8xf32>
    %44 = math.exp %43 : vector<32x8xf32>
    %cst_22 = arith.constant dense<0.000000e+00> : vector<32xf32>
    %45 = vector.multi_reduction <add>, %44, %cst_22 [1] : vector<32x8xf32> to vector<32xf32>
    %46 = vector.shape_cast %45 : vector<32xf32> to vector<32x1xf32>
    %47 = tpu.reciprocal %46 {approx = true} : vector<32x1xf32> -> vector<32x1xf32>
    %48 = vector.broadcast %47 : vector<32x1xf32> to vector<32x8xf32>
    %49 = arith.mulf %44, %48 : vector<32x8xf32>
    %50 = vector.extract_strided_slice %49 {offsets = [0, 0], sizes = [8, 8], strides = [1, 1]} : vector<32x8xf32> to vector<8x8xf32>
    %51 = vector.extract_strided_slice %25 {offsets = [0, 0], sizes = [8, 8], strides = [1, 1]} : vector<8x32xf32> to vector<8x8xf32>
    %cst_23 = arith.constant dense<0.000000e+00> : vector<8x8xf32>
    %52 = tpu.matmul %50, %51, %cst_23 {dimension_numbers = #tpu.dot_dimension_numbers<[1], [0], [0], [1], [0, 0, 1, 1], [], []>} : vector<8x8xf32>, vector<8x8xf32>, vector<8x8xf32> -> vector<8x8xf32>
    %53 = vector.extract_strided_slice %49 {offsets = [8, 0], sizes = [8, 8], strides = [1, 1]} : vector<32x8xf32> to vector<8x8xf32>
    %54 = vector.extract_strided_slice %25 {offsets = [0, 8], sizes = [8, 8], strides = [1, 1]} : vector<8x32xf32> to vector<8x8xf32>
    %cst_24 = arith.constant dense<0.000000e+00> : vector<8x8xf32>
    %55 = tpu.matmul %53, %54, %cst_24 {dimension_numbers = #tpu.dot_dimension_numbers<[1], [0], [0], [1], [0, 0, 1, 1], [], []>} : vector<8x8xf32>, vector<8x8xf32>, vector<8x8xf32> -> vector<8x8xf32>
    %56 = vector.extract_strided_slice %49 {offsets = [16, 0], sizes = [8, 8], strides = [1, 1]} : vector<32x8xf32> to vector<8x8xf32>
    %57 = vector.extract_strided_slice %25 {offsets = [0, 16], sizes = [8, 8], strides = [1, 1]} : vector<8x32xf32> to vector<8x8xf32>
    %cst_25 = arith.constant dense<0.000000e+00> : vector<8x8xf32>
    %58 = tpu.matmul %56, %57, %cst_25 {dimension_numbers = #tpu.dot_dimension_numbers<[1], [0], [0], [1], [0, 0, 1, 1], [], []>} : vector<8x8xf32>, vector<8x8xf32>, vector<8x8xf32> -> vector<8x8xf32>
    %59 = vector.extract_strided_slice %49 {offsets = [24, 0], sizes = [8, 8], strides = [1, 1]} : vector<32x8xf32> to vector<8x8xf32>
    %60 = vector.extract_strided_slice %25 {offsets = [0, 24], sizes = [8, 8], strides = [1, 1]} : vector<8x32xf32> to vector<8x8xf32>
    %cst_26 = arith.constant dense<0.000000e+00> : vector<8x8xf32>
    %61 = tpu.matmul %59, %60, %cst_26 {dimension_numbers = #tpu.dot_dimension_numbers<[1], [0], [0], [1], [0, 0, 1, 1], [], []>} : vector<8x8xf32>, vector<8x8xf32>, vector<8x8xf32> -> vector<8x8xf32>
    %62 = tpu.concatenate %52, %55, %58, %61 in 1 : vector<8x8xf32>, vector<8x8xf32>, vector<8x8xf32>, vector<8x8xf32> -> vector<8x32xf32>
    %cst_27 = arith.constant dense<0.000000e+00> : vector<8x32xf32>
    %63 = tpu.matmul %62, %5, %cst_27 {dimension_numbers = #tpu.dot_dimension_numbers<[1], [0], [0], [1], [0, 0, 1, 1], [], []>} : vector<8x32xf32>, vector<32x32xf32>, vector<8x32xf32> -> vector<8x32xf32>
    %64 = vector.broadcast %13 : vector<1x32xf32> to vector<8x32xf32>
    %65 = arith.addf %63, %64 : vector<8x32xf32>
    %66 = arith.addf %1, %65 : vector<8x32xf32>
    %cst_28 = arith.constant dense<0.000000e+00> : vector<8xf32>
    %67 = vector.multi_reduction <add>, %66, %cst_28 [1] : vector<8x32xf32> to vector<8xf32>
    %68 = vector.shape_cast %67 : vector<8xf32> to vector<8x1xf32>
    %cst_29 = arith.constant 3.200000e+01 : f32
    %69 = vector.broadcast %cst_29 : f32 to vector<8x1xf32>
    %70 = arith.divf %68, %69 : vector<8x1xf32>
    %71 = vector.broadcast %70 : vector<8x1xf32> to vector<8x32xf32>
    %72 = arith.subf %66, %71 : vector<8x32xf32>
    %73 = vector.broadcast %70 : vector<8x1xf32> to vector<8x32xf32>
    %74 = arith.subf %66, %73 : vector<8x32xf32>
    %75 = arith.mulf %72, %74 : vector<8x32xf32>
    %cst_30 = arith.constant dense<0.000000e+00> : vector<8xf32>
    %76 = vector.multi_reduction <add>, %75, %cst_30 [1] : vector<8x32xf32> to vector<8xf32>
    %77 = vector.shape_cast %76 : vector<8xf32> to vector<8x1xf32>
    %cst_31 = arith.constant 3.200000e+01 : f32
    %78 = vector.broadcast %cst_31 : f32 to vector<8x1xf32>
    %79 = arith.divf %77, %78 : vector<8x1xf32>
    %80 = vector.broadcast %70 : vector<8x1xf32> to vector<8x32xf32>
    %81 = arith.subf %66, %80 : vector<8x32xf32>
    %cst_32 = arith.constant 9.99999974E-6 : f32
    %82 = vector.broadcast %cst_32 : f32 to vector<8x1xf32>
    %83 = arith.addf %79, %82 : vector<8x1xf32>
    %84 = math.rsqrt %83 : vector<8x1xf32>
    %85 = vector.broadcast %84 : vector<8x1xf32> to vector<8x32xf32>
    %86 = arith.mulf %81, %85 : vector<8x32xf32>
    %87 = vector.broadcast %16 : vector<1x32xf32> to vector<8x32xf32>
    %88 = arith.mulf %86, %87 : vector<8x32xf32>
    %89 = vector.broadcast %17 : vector<1x32xf32> to vector<8x32xf32>
    %90 = arith.addf %88, %89 : vector<8x32xf32>
    %cst_33 = arith.constant dense<0.000000e+00> : vector<8x64xf32>
    %91 = tpu.matmul %90, %7, %cst_33 {dimension_numbers = #tpu.dot_dimension_numbers<[1], [0], [0], [1], [0, 0, 1, 1], [], []>} : vector<8x32xf32>, vector<32x64xf32>, vector<8x64xf32> -> vector<8x64xf32>
    %92 = vector.broadcast %14 : vector<1x64xf32> to vector<8x64xf32>
    %93 = arith.addf %91, %92 : vector<8x64xf32>
    %cst_34 = arith.constant 0.000000e+00 : f32
    %94 = vector.broadcast %cst_34 : f32 to vector<8x64xf32>
    %95 = arith.maximumf %93, %94 : vector<8x64xf32>
    %cst_35 = arith.constant dense<0.000000e+00> : vector<8x32xf32>
    %96 = tpu.matmul %95, %9, %cst_35 {dimension_numbers = #tpu.dot_dimension_numbers<[1], [0], [0], [1], [0, 0, 1, 1], [], []>} : vector<8x64xf32>, vector<64x32xf32>, vector<8x32xf32> -> vector<8x32xf32>
    %97 = vector.broadcast %15 : vector<1x32xf32> to vector<8x32xf32>
    %98 = arith.addf %96, %97 : vector<8x32xf32>
    %99 = arith.addf %90, %98 : vector<8x32xf32>
    %cst_36 = arith.constant dense<0.000000e+00> : vector<8xf32>
    %100 = vector.multi_reduction <add>, %99, %cst_36 [1] : vector<8x32xf32> to vector<8xf32>
    %101 = vector.shape_cast %100 : vector<8xf32> to vector<8x1xf32>
    %cst_37 = arith.constant 3.200000e+01 : f32
    %102 = vector.broadcast %cst_37 : f32 to vector<8x1xf32>
    %103 = arith.divf %101, %102 : vector<8x1xf32>
    %104 = vector.broadcast %103 : vector<8x1xf32> to vector<8x32xf32>
    %105 = arith.subf %99, %104 : vector<8x32xf32>
    %106 = vector.broadcast %103 : vector<8x1xf32> to vector<8x32xf32>
    %107 = arith.subf %99, %106 : vector<8x32xf32>
    %108 = arith.mulf %105, %107 : vector<8x32xf32>
    %cst_38 = arith.constant dense<0.000000e+00> : vector<8xf32>
    %109 = vector.multi_reduction <add>, %108, %cst_38 [1] : vector<8x32xf32> to vector<8xf32>
    %110 = vector.shape_cast %109 : vector<8xf32> to vector<8x1xf32>
    %cst_39 = arith.constant 3.200000e+01 : f32
    %111 = vector.broadcast %cst_39 : f32 to vector<8x1xf32>
    %112 = arith.divf %110, %111 : vector<8x1xf32>
    %113 = vector.broadcast %103 : vector<8x1xf32> to vector<8x32xf32>
    %114 = arith.subf %99, %113 : vector<8x32xf32>
    %cst_40 = arith.constant 9.99999974E-6 : f32
    %115 = vector.broadcast %cst_40 : f32 to vector<8x1xf32>
    %116 = arith.addf %112, %115 : vector<8x1xf32>
    %117 = math.rsqrt %116 : vector<8x1xf32>
    %118 = vector.broadcast %117 : vector<8x1xf32> to vector<8x32xf32>
    %119 = arith.mulf %114, %118 : vector<8x32xf32>
    %120 = vector.broadcast %18 : vector<1x32xf32> to vector<8x32xf32>
    %121 = arith.mulf %119, %120 : vector<8x32xf32>
    %122 = vector.broadcast %19 : vector<1x32xf32> to vector<8x32xf32>
    %123 = arith.addf %121, %122 : vector<8x32xf32>
    %c1 = arith.constant 1 : index
    %c0_41 = arith.constant 0 : index
    %c0_42 = arith.constant 0 : index
    %124 = vector.load %arg2[%c1, %c0_41, %c0_42] : memref<2x32x96xf32, #tpu.memory_space<vmem>>, vector<1x32x96xf32>
    %125 = vector.shape_cast %124 : vector<1x32x96xf32> to vector<32x96xf32>
    %c1_43 = arith.constant 1 : index
    %c0_44 = arith.constant 0 : index
    %c0_45 = arith.constant 0 : index
    %126 = vector.load %arg3[%c1_43, %c0_44, %c0_45] : memref<2x32x32xf32, #tpu.memory_space<vmem>>, vector<1x32x32xf32>
    %127 = vector.shape_cast %126 : vector<1x32x32xf32> to vector<32x32xf32>
    %c1_46 = arith.constant 1 : index
    %c0_47 = arith.constant 0 : index
    %c0_48 = arith.constant 0 : index
    %128 = vector.load %arg4[%c1_46, %c0_47, %c0_48] : memref<2x32x64xf32, #tpu.memory_space<vmem>>, vector<1x32x64xf32>
    %129 = vector.shape_cast %128 : vector<1x32x64xf32> to vector<32x64xf32>
    %c1_49 = arith.constant 1 : index
    %c0_50 = arith.constant 0 : index
    %c0_51 = arith.constant 0 : index
    %130 = vector.load %arg5[%c1_49, %c0_50, %c0_51] : memref<2x64x32xf32, #tpu.memory_space<vmem>>, vector<1x64x32xf32>
    %131 = vector.shape_cast %130 : vector<1x64x32xf32> to vector<64x32xf32>
    %c1_52 = arith.constant 1 : index
    %c0_53 = arith.constant 0 : index
    %c0_54 = arith.constant 0 : index
    %132 = vector.load %arg6[%c1_52, %c0_53, %c0_54] : memref<2x8x128xf32, #tpu.memory_space<vmem>>, vector<1x8x128xf32>
    %133 = vector.shape_cast %132 : vector<1x8x128xf32> to vector<8x128xf32>
    %134 = vector.extract_strided_slice %133 {offsets = [0, 0], sizes = [1, 96], strides = [1, 1]} : vector<8x128xf32> to vector<1x96xf32>
    %135 = vector.extract_strided_slice %133 {offsets = [1, 0], sizes = [1, 32], strides = [1, 1]} : vector<8x128xf32> to vector<1x32xf32>
    %136 = vector.extract_strided_slice %133 {offsets = [2, 0], sizes = [1, 64], strides = [1, 1]} : vector<8x128xf32> to vector<1x64xf32>
    %137 = vector.extract_strided_slice %133 {offsets = [3, 0], sizes = [1, 32], strides = [1, 1]} : vector<8x128xf32> to vector<1x32xf32>
    %138 = vector.extract_strided_slice %133 {offsets = [4, 0], sizes = [1, 32], strides = [1, 1]} : vector<8x128xf32> to vector<1x32xf32>
    %139 = vector.extract_strided_slice %133 {offsets = [5, 0], sizes = [1, 32], strides = [1, 1]} : vector<8x128xf32> to vector<1x32xf32>
    %140 = vector.extract_strided_slice %133 {offsets = [6, 0], sizes = [1, 32], strides = [1, 1]} : vector<8x128xf32> to vector<1x32xf32>
    %141 = vector.extract_strided_slice %133 {offsets = [7, 0], sizes = [1, 32], strides = [1, 1]} : vector<8x128xf32> to vector<1x32xf32>
    %cst_55 = arith.constant dense<0.000000e+00> : vector<8x96xf32>
    %142 = tpu.matmul %123, %125, %cst_55 {dimension_numbers = #tpu.dot_dimension_numbers<[1], [0], [0], [1], [0, 0, 1, 1], [], []>} : vector<8x32xf32>, vector<32x96xf32>, vector<8x96xf32> -> vector<8x96xf32>
    %143 = vector.broadcast %134 : vector<1x96xf32> to vector<8x96xf32>
    %144 = arith.addf %142, %143 : vector<8x96xf32>
    %145 = vector.extract_strided_slice %144 {offsets = [0, 0], sizes = [8, 32], strides = [1, 1]} : vector<8x96xf32> to vector<8x32xf32>
    %146 = vector.extract_strided_slice %144 {offsets = [0, 32], sizes = [8, 32], strides = [1, 1]} : vector<8x96xf32> to vector<8x32xf32>
    %147 = vector.extract_strided_slice %144 {offsets = [0, 64], sizes = [8, 32], strides = [1, 1]} : vector<8x96xf32> to vector<8x32xf32>
    %148 = tpu.transpose %146, [1, 0] : vector<8x32xf32> -> vector<32x8xf32>
    %149 = vector.extract_strided_slice %145 {offsets = [0, 0], sizes = [8, 8], strides = [1, 1]} : vector<8x32xf32> to vector<8x8xf32>
    %150 = vector.extract_strided_slice %148 {offsets = [0, 0], sizes = [8, 8], strides = [1, 1]} : vector<32x8xf32> to vector<8x8xf32>
    %cst_56 = arith.constant dense<0.000000e+00> : vector<8x8xf32>
    %151 = tpu.matmul %149, %150, %cst_56 {dimension_numbers = #tpu.dot_dimension_numbers<[1], [0], [0], [1], [0, 0, 1, 1], [], []>} : vector<8x8xf32>, vector<8x8xf32>, vector<8x8xf32> -> vector<8x8xf32>
    %152 = vector.extract_strided_slice %145 {offsets = [0, 8], sizes = [8, 8], strides = [1, 1]} : vector<8x32xf32> to vector<8x8xf32>
    %153 = vector.extract_strided_slice %148 {offsets = [8, 0], sizes = [8, 8], strides = [1, 1]} : vector<32x8xf32> to vector<8x8xf32>
    %cst_57 = arith.constant dense<0.000000e+00> : vector<8x8xf32>
    %154 = tpu.matmul %152, %153, %cst_57 {dimension_numbers = #tpu.dot_dimension_numbers<[1], [0], [0], [1], [0, 0, 1, 1], [], []>} : vector<8x8xf32>, vector<8x8xf32>, vector<8x8xf32> -> vector<8x8xf32>
    %155 = vector.extract_strided_slice %145 {offsets = [0, 16], sizes = [8, 8], strides = [1, 1]} : vector<8x32xf32> to vector<8x8xf32>
    %156 = vector.extract_strided_slice %148 {offsets = [16, 0], sizes = [8, 8], strides = [1, 1]} : vector<32x8xf32> to vector<8x8xf32>
    %cst_58 = arith.constant dense<0.000000e+00> : vector<8x8xf32>
    %157 = tpu.matmul %155, %156, %cst_58 {dimension_numbers = #tpu.dot_dimension_numbers<[1], [0], [0], [1], [0, 0, 1, 1], [], []>} : vector<8x8xf32>, vector<8x8xf32>, vector<8x8xf32> -> vector<8x8xf32>
    %158 = vector.extract_strided_slice %145 {offsets = [0, 24], sizes = [8, 8], strides = [1, 1]} : vector<8x32xf32> to vector<8x8xf32>
    %159 = vector.extract_strided_slice %148 {offsets = [24, 0], sizes = [8, 8], strides = [1, 1]} : vector<32x8xf32> to vector<8x8xf32>
    %cst_59 = arith.constant dense<0.000000e+00> : vector<8x8xf32>
    %160 = tpu.matmul %158, %159, %cst_59 {dimension_numbers = #tpu.dot_dimension_numbers<[1], [0], [0], [1], [0, 0, 1, 1], [], []>} : vector<8x8xf32>, vector<8x8xf32>, vector<8x8xf32> -> vector<8x8xf32>
    %161 = tpu.concatenate %151, %154, %157, %160 in 0 : vector<8x8xf32>, vector<8x8xf32>, vector<8x8xf32>, vector<8x8xf32> -> vector<32x8xf32>
    %cst_60 = arith.constant dense<0xFF800000> : vector<32xf32>
    %162 = vector.multi_reduction <maximumf>, %161, %cst_60 [1] : vector<32x8xf32> to vector<32xf32>
    %163 = vector.shape_cast %162 : vector<32xf32> to vector<32x1xf32>
    %164 = vector.broadcast %163 : vector<32x1xf32> to vector<32x8xf32>
    %165 = arith.subf %161, %164 : vector<32x8xf32>
    %166 = math.exp %165 : vector<32x8xf32>
    %cst_61 = arith.constant dense<0.000000e+00> : vector<32xf32>
    %167 = vector.multi_reduction <add>, %166, %cst_61 [1] : vector<32x8xf32> to vector<32xf32>
    %168 = vector.shape_cast %167 : vector<32xf32> to vector<32x1xf32>
    %169 = tpu.reciprocal %168 {approx = true} : vector<32x1xf32> -> vector<32x1xf32>
    %170 = vector.broadcast %169 : vector<32x1xf32> to vector<32x8xf32>
    %171 = arith.mulf %166, %170 : vector<32x8xf32>
    %172 = vector.extract_strided_slice %171 {offsets = [0, 0], sizes = [8, 8], strides = [1, 1]} : vector<32x8xf32> to vector<8x8xf32>
    %173 = vector.extract_strided_slice %147 {offsets = [0, 0], sizes = [8, 8], strides = [1, 1]} : vector<8x32xf32> to vector<8x8xf32>
    %cst_62 = arith.constant dense<0.000000e+00> : vector<8x8xf32>
    %174 = tpu.matmul %172, %173, %cst_62 {dimension_numbers = #tpu.dot_dimension_numbers<[1], [0], [0], [1], [0, 0, 1, 1], [], []>} : vector<8x8xf32>, vector<8x8xf32>, vector<8x8xf32> -> vector<8x8xf32>
    %175 = vector.extract_strided_slice %171 {offsets = [8, 0], sizes = [8, 8], strides = [1, 1]} : vector<32x8xf32> to vector<8x8xf32>
    %176 = vector.extract_strided_slice %147 {offsets = [0, 8], sizes = [8, 8], strides = [1, 1]} : vector<8x32xf32> to vector<8x8xf32>
    %cst_63 = arith.constant dense<0.000000e+00> : vector<8x8xf32>
    %177 = tpu.matmul %175, %176, %cst_63 {dimension_numbers = #tpu.dot_dimension_numbers<[1], [0], [0], [1], [0, 0, 1, 1], [], []>} : vector<8x8xf32>, vector<8x8xf32>, vector<8x8xf32> -> vector<8x8xf32>
    %178 = vector.extract_strided_slice %171 {offsets = [16, 0], sizes = [8, 8], strides = [1, 1]} : vector<32x8xf32> to vector<8x8xf32>
    %179 = vector.extract_strided_slice %147 {offsets = [0, 16], sizes = [8, 8], strides = [1, 1]} : vector<8x32xf32> to vector<8x8xf32>
    %cst_64 = arith.constant dense<0.000000e+00> : vector<8x8xf32>
    %180 = tpu.matmul %178, %179, %cst_64 {dimension_numbers = #tpu.dot_dimension_numbers<[1], [0], [0], [1], [0, 0, 1, 1], [], []>} : vector<8x8xf32>, vector<8x8xf32>, vector<8x8xf32> -> vector<8x8xf32>
    %181 = vector.extract_strided_slice %171 {offsets = [24, 0], sizes = [8, 8], strides = [1, 1]} : vector<32x8xf32> to vector<8x8xf32>
    %182 = vector.extract_strided_slice %147 {offsets = [0, 24], sizes = [8, 8], strides = [1, 1]} : vector<8x32xf32> to vector<8x8xf32>
    %cst_65 = arith.constant dense<0.000000e+00> : vector<8x8xf32>
    %183 = tpu.matmul %181, %182, %cst_65 {dimension_numbers = #tpu.dot_dimension_numbers<[1], [0], [0], [1], [0, 0, 1, 1], [], []>} : vector<8x8xf32>, vector<8x8xf32>, vector<8x8xf32> -> vector<8x8xf32>
    %184 = tpu.concatenate %174, %177, %180, %183 in 1 : vector<8x8xf32>, vector<8x8xf32>, vector<8x8xf32>, vector<8x8xf32> -> vector<8x32xf32>
    %cst_66 = arith.constant dense<0.000000e+00> : vector<8x32xf32>
    %185 = tpu.matmul %184, %127, %cst_66 {dimension_numbers = #tpu.dot_dimension_numbers<[1], [0], [0], [1], [0, 0, 1, 1], [], []>} : vector<8x32xf32>, vector<32x32xf32>, vector<8x32xf32> -> vector<8x32xf32>
    %186 = vector.broadcast %135 : vector<1x32xf32> to vector<8x32xf32>
    %187 = arith.addf %185, %186 : vector<8x32xf32>
    %188 = arith.addf %123, %187 : vector<8x32xf32>
    %cst_67 = arith.constant dense<0.000000e+00> : vector<8xf32>
    %189 = vector.multi_reduction <add>, %188, %cst_67 [1] : vector<8x32xf32> to vector<8xf32>
    %190 = vector.shape_cast %189 : vector<8xf32> to vector<8x1xf32>
    %cst_68 = arith.constant 3.200000e+01 : f32
    %191 = vector.broadcast %cst_68 : f32 to vector<8x1xf32>
    %192 = arith.divf %190, %191 : vector<8x1xf32>
    %193 = vector.broadcast %192 : vector<8x1xf32> to vector<8x32xf32>
    %194 = arith.subf %188, %193 : vector<8x32xf32>
    %195 = vector.broadcast %192 : vector<8x1xf32> to vector<8x32xf32>
    %196 = arith.subf %188, %195 : vector<8x32xf32>
    %197 = arith.mulf %194, %196 : vector<8x32xf32>
    %cst_69 = arith.constant dense<0.000000e+00> : vector<8xf32>
    %198 = vector.multi_reduction <add>, %197, %cst_69 [1] : vector<8x32xf32> to vector<8xf32>
    %199 = vector.shape_cast %198 : vector<8xf32> to vector<8x1xf32>
    %cst_70 = arith.constant 3.200000e+01 : f32
    %200 = vector.broadcast %cst_70 : f32 to vector<8x1xf32>
    %201 = arith.divf %199, %200 : vector<8x1xf32>
    %202 = vector.broadcast %192 : vector<8x1xf32> to vector<8x32xf32>
    %203 = arith.subf %188, %202 : vector<8x32xf32>
    %cst_71 = arith.constant 9.99999974E-6 : f32
    %204 = vector.broadcast %cst_71 : f32 to vector<8x1xf32>
    %205 = arith.addf %201, %204 : vector<8x1xf32>
    %206 = math.rsqrt %205 : vector<8x1xf32>
    %207 = vector.broadcast %206 : vector<8x1xf32> to vector<8x32xf32>
    %208 = arith.mulf %203, %207 : vector<8x32xf32>
    %209 = vector.broadcast %138 : vector<1x32xf32> to vector<8x32xf32>
    %210 = arith.mulf %208, %209 : vector<8x32xf32>
    %211 = vector.broadcast %139 : vector<1x32xf32> to vector<8x32xf32>
    %212 = arith.addf %210, %211 : vector<8x32xf32>
    %cst_72 = arith.constant dense<0.000000e+00> : vector<8x64xf32>
    %213 = tpu.matmul %212, %129, %cst_72 {dimension_numbers = #tpu.dot_dimension_numbers<[1], [0], [0], [1], [0, 0, 1, 1], [], []>} : vector<8x32xf32>, vector<32x64xf32>, vector<8x64xf32> -> vector<8x64xf32>
    %214 = vector.broadcast %136 : vector<1x64xf32> to vector<8x64xf32>
    %215 = arith.addf %213, %214 : vector<8x64xf32>
    %cst_73 = arith.constant 0.000000e+00 : f32
    %216 = vector.broadcast %cst_73 : f32 to vector<8x64xf32>
    %217 = arith.maximumf %215, %216 : vector<8x64xf32>
    %cst_74 = arith.constant dense<0.000000e+00> : vector<8x32xf32>
    %218 = tpu.matmul %217, %131, %cst_74 {dimension_numbers = #tpu.dot_dimension_numbers<[1], [0], [0], [1], [0, 0, 1, 1], [], []>} : vector<8x64xf32>, vector<64x32xf32>, vector<8x32xf32> -> vector<8x32xf32>
    %219 = vector.broadcast %137 : vector<1x32xf32> to vector<8x32xf32>
    %220 = arith.addf %218, %219 : vector<8x32xf32>
    %221 = arith.addf %212, %220 : vector<8x32xf32>
    %cst_75 = arith.constant dense<0.000000e+00> : vector<8xf32>
    %222 = vector.multi_reduction <add>, %221, %cst_75 [1] : vector<8x32xf32> to vector<8xf32>
    %223 = vector.shape_cast %222 : vector<8xf32> to vector<8x1xf32>
    %cst_76 = arith.constant 3.200000e+01 : f32
    %224 = vector.broadcast %cst_76 : f32 to vector<8x1xf32>
    %225 = arith.divf %223, %224 : vector<8x1xf32>
    %226 = vector.broadcast %225 : vector<8x1xf32> to vector<8x32xf32>
    %227 = arith.subf %221, %226 : vector<8x32xf32>
    %228 = vector.broadcast %225 : vector<8x1xf32> to vector<8x32xf32>
    %229 = arith.subf %221, %228 : vector<8x32xf32>
    %230 = arith.mulf %227, %229 : vector<8x32xf32>
    %cst_77 = arith.constant dense<0.000000e+00> : vector<8xf32>
    %231 = vector.multi_reduction <add>, %230, %cst_77 [1] : vector<8x32xf32> to vector<8xf32>
    %232 = vector.shape_cast %231 : vector<8xf32> to vector<8x1xf32>
    %cst_78 = arith.constant 3.200000e+01 : f32
    %233 = vector.broadcast %cst_78 : f32 to vector<8x1xf32>
    %234 = arith.divf %232, %233 : vector<8x1xf32>
    %235 = vector.broadcast %225 : vector<8x1xf32> to vector<8x32xf32>
    %236 = arith.subf %221, %235 : vector<8x32xf32>
    %cst_79 = arith.constant 9.99999974E-6 : f32
    %237 = vector.broadcast %cst_79 : f32 to vector<8x1xf32>
    %238 = arith.addf %234, %237 : vector<8x1xf32>
    %239 = math.rsqrt %238 : vector<8x1xf32>
    %240 = vector.broadcast %239 : vector<8x1xf32> to vector<8x32xf32>
    %241 = arith.mulf %236, %240 : vector<8x32xf32>
    %242 = vector.broadcast %140 : vector<1x32xf32> to vector<8x32xf32>
    %243 = arith.mulf %241, %242 : vector<8x32xf32>
    %244 = vector.broadcast %141 : vector<1x32xf32> to vector<8x32xf32>
    %245 = arith.addf %243, %244 : vector<8x32xf32>
    %c0_80 = arith.constant 0 : index
    %c0_81 = arith.constant 0 : index
    %246 = vector.load %arg7[%c0_80, %c0_81] : memref<32x128xf32, #tpu.memory_space<vmem>>, vector<32x128xf32>
    %cst_82 = arith.constant dense<0.000000e+00> : vector<8x128xf32>
    %247 = tpu.matmul %245, %246, %cst_82 {dimension_numbers = #tpu.dot_dimension_numbers<[1], [0], [0], [1], [0, 0, 1, 1], [], []>} : vector<8x32xf32>, vector<32x128xf32>, vector<8x128xf32> -> vector<8x128xf32>
    %c0_83 = arith.constant 0 : index
    %c0_84 = arith.constant 0 : index
    %248 = vector.load %arg8[%c0_83, %c0_84] : memref<1x128xf32, #tpu.memory_space<vmem>>, vector<1x128xf32>
    %249 = vector.broadcast %248 : vector<1x128xf32> to vector<8x128xf32>
    %250 = arith.addf %247, %249 : vector<8x128xf32>
    %c0_85 = arith.constant 0 : index
    %c0_86 = arith.constant 0 : index
    %c0_87 = arith.constant 0 : index
    %251 = vector.load %arg9[%c0_85, %c0_86, %c0_87] : memref<1x8x128xf32, #tpu.memory_space<vmem>>, vector<1x8x128xf32>
    %252 = vector.shape_cast %251 : vector<1x8x128xf32> to vector<8x128xf32>
    %253 = vector.shape_cast %250 : vector<8x128xf32> to vector<1x8x128xf32>
    tpu.vector_store %arg9[%c0_85, %c0_86, %c0_87], %253 {strides = array<i32>} : memref<1x8x128xf32, #tpu.memory_space<vmem>>, vector<1x8x128xf32>,
    return
  }
  func.func @transform_0(%arg0: i32) -> (i32, i32, i32) {
    %c0_i32 = arith.constant 0 : i32
    %c0_i32_0 = arith.constant 0 : i32
    %c0_i32_1 = arith.constant 0 : i32
    return %arg0, %c0_i32, %c0_i32_0 : i32, i32, i32
  }
  func.func @transform_1(%arg0: i32) -> (i32, i32, i32) {
    %c0_i32 = arith.constant 0 : i32
    %c0_i32_0 = arith.constant 0 : i32
    %c0_i32_1 = arith.constant 0 : i32
    %c0_i32_2 = arith.constant 0 : i32
    return %c0_i32, %c0_i32_0, %c0_i32_1 : i32, i32, i32
  }
  func.func @transform_2(%arg0: i32) -> (i32, i32, i32) {
    %c0_i32 = arith.constant 0 : i32
    %c0_i32_0 = arith.constant 0 : i32
    %c0_i32_1 = arith.constant 0 : i32
    %c0_i32_2 = arith.constant 0 : i32
    return %c0_i32, %c0_i32_0, %c0_i32_1 : i32, i32, i32
  }
  func.func @transform_3(%arg0: i32) -> (i32, i32, i32) {
    %c0_i32 = arith.constant 0 : i32
    %c0_i32_0 = arith.constant 0 : i32
    %c0_i32_1 = arith.constant 0 : i32
    %c0_i32_2 = arith.constant 0 : i32
    return %c0_i32, %c0_i32_0, %c0_i32_1 : i32, i32, i32
  }
  func.func @transform_4(%arg0: i32) -> (i32, i32, i32) {
    %c0_i32 = arith.constant 0 : i32
    %c0_i32_0 = arith.constant 0 : i32
    %c0_i32_1 = arith.constant 0 : i32
    %c0_i32_2 = arith.constant 0 : i32
    return %c0_i32, %c0_i32_0, %c0_i32_1 : i32, i32, i32
  }
  func.func @transform_5(%arg0: i32) -> (i32, i32, i32) {
    %c0_i32 = arith.constant 0 : i32
    %c0_i32_0 = arith.constant 0 : i32
    %c0_i32_1 = arith.constant 0 : i32
    %c0_i32_2 = arith.constant 0 : i32
    return %c0_i32, %c0_i32_0, %c0_i32_1 : i32, i32, i32
  }
  func.func @transform_6(%arg0: i32) -> (i32, i32) {
    %c0_i32 = arith.constant 0 : i32
    %c0_i32_0 = arith.constant 0 : i32
    %c0_i32_1 = arith.constant 0 : i32
    return %c0_i32, %c0_i32_0 : i32, i32
  }
  func.func @transform_7(%arg0: i32) -> (i32, i32) {
    %c0_i32 = arith.constant 0 : i32
    %c0_i32_0 = arith.constant 0 : i32
    %c0_i32_1 = arith.constant 0 : i32
    return %c0_i32, %c0_i32_0 : i32, i32
  }
  func.func @transform_8(%arg0: i32) -> (i32, i32, i32) {
    %c0_i32 = arith.constant 0 : i32
    %c0_i32_0 = arith.constant 0 : i32
    %c0_i32_1 = arith.constant 0 : i32
    return %arg0, %c0_i32, %c0_i32_0 : i32, i32, i32
  }
}

</mosaic_0001>

<llo_original>
// kernel: mapping_forward.1
$region0: #{mapping_forward.1}
  #allocation0 [shape = 'u32[]', space=smem, size = 0x4, offset = 0x4, fixed_abs, tag = 'smem constant byte address 0x4 - core index']
  #allocation1 [shape = 'u32[72,128]{1,0:T(1,128)}', space=vmem, size = 0x9000, scoped, tag = 'internal scratch']
  %s0 = inlined_call_operand.hbm [shape: f32[1,8,32], index: 0, kind: input, shape index: {}]
  %s1 = inlined_call_operand.vmem [shape: f32[2,32,96], index: 1, kind: input, shape index: {}]
  %s2 = inlined_call_operand.vmem [shape: f32[2,32,32], index: 2, kind: input, shape index: {}]
  %s3 = inlined_call_operand.vmem [shape: f32[2,32,64], index: 3, kind: input, shape index: {}]
  %s4 = inlined_call_operand.vmem [shape: f32[2,64,32], index: 4, kind: input, shape index: {}]
  %s5 = inlined_call_operand.hbm [shape: f32[2,8,128], index: 5, kind: input, shape index: {}]
  %s6 = inlined_call_operand.hbm [shape: f32[32,128], index: 6, kind: input, shape index: {}]
  %s7 = inlined_call_operand.vmem [shape: f32[1,128], index: 7, kind: input, shape index: {}]
  %s8 = inlined_call_operand.vmem [shape: f32[1,8,128], index: 8, kind: output, shape index: {}]
  %s9 = sld [smem:[#allocation0]]
  $region54: #{mapping_forward.1} parent=0
    _
  %s11 = ssub.s32 1, %s9
  %s12 = scalar_select 0, %s11, %s9
  $region1: #{mapping_forward.1} parent=0
    #allocation2 [shape = 'u8[4096]{0}', space=vmem, size = 0x1000, scoped, tag = 'input window, operand 0, single buffered']
    #allocation3 [shape = 's32[1]{0}', space=sflag, size = 0x4, scoped, tag = 'scoped memory for mapping_forward.1']
    #allocation4 [shape = 'u8[8192]{0}', space=vmem, size = 0x2000, scoped, tag = 'input window, operand 5, single buffered']
    #allocation5 [shape = 's32[1]{0}', space=sflag, size = 0x4, scoped, tag = 'scoped memory for mapping_forward.1']
    #allocation6 [shape = 'u8[16384]{0}', space=vmem, size = 0x4000, scoped, tag = 'input window, operand 6, single buffered']
    %13 = vsyncpa [#allocation3], 0
    %14 = vsyncpa [#allocation5], 0
    // Predicated region
    $region2: #{mapping_forward.1} parent=1 // pred_check
      _
    $region3: #{mapping_forward.1} parent=1 // pred_check_branch
      %16 = sbr.rel (0) target = $region5
    $region4: #{mapping_forward.1} parent=1 // pred_region
      %18 = vsyncadd [#allocation3], 0
      %s20 = sshll.u32 %s0, 4
      %s21 = int_to_ptr.hbm [resolvable:$true] %s20
      %s22 = sshll.u32 [#allocation2], 4
      %s23 = int_to_ptr.vmem [resolvable:$true] %s22
      %25 = dma.hbm_to_vmem [thread:$0]  %s21, 128, %s23, [#allocation3]
    $region5: #{mapping_forward.1} parent=1 // pred_fallthru
      _
    // Predicated region
    $region6: #{mapping_forward.1} parent=1 // pred_check
      _
    $region7: #{mapping_forward.1} parent=1 // pred_check_branch
      %27 = sbr.rel (0) target = $region9
    $region8: #{mapping_forward.1} parent=1 // pred_region
      _
    $region9: #{mapping_forward.1} parent=1 // pred_fallthru
      _
    // Predicated region
    $region10: #{mapping_forward.1} parent=1 // pred_check
      _
    $region11: #{mapping_forward.1} parent=1 // pred_check_branch
      %29 = sbr.rel (0) target = $region13
    $region12: #{mapping_forward.1} parent=1 // pred_region
      _
    $region13: #{mapping_forward.1} parent=1 // pred_fallthru
      _
    // Predicated region
    $region14: #{mapping_forward.1} parent=1 // pred_check
      _
    $region15: #{mapping_forward.1} parent=1 // pred_check_branch
      %31 = sbr.rel (0) target = $region17
    $region16: #{mapping_forward.1} parent=1 // pred_region
      _
    $region17: #{mapping_forward.1} parent=1 // pred_fallthru
      _
    // Predicated region
    $region18: #{mapping_forward.1} parent=1 // pred_check
      _
    $region19: #{mapping_forward.1} parent=1 // pred_check_branch
      %33 = sbr.rel (0) target = $region21
    $region20: #{mapping_forward.1} parent=1 // pred_region
      _
    $region21: #{mapping_forward.1} parent=1 // pred_fallthru
      _
    // Predicated region
    $region22: #{mapping_forward.1} parent=1 // pred_check
      _
    $region23: #{mapping_forward.1} parent=1 // pred_check_branch
      %35 = sbr.rel (0) target = $region25
    $region24: #{mapping_forward.1} parent=1 // pred_region
      %37 = vsyncadd [#allocation5], 0
      %s38 = sshll.u32 %s5, 4
      %s39 = int_to_ptr.hbm [resolvable:$true] %s38
      %s40 = sshll.u32 [#allocation4], 4
      %s41 = int_to_ptr.vmem [resolvable:$true] %s40
      %46 = dma.hbm_to_vmem [thread:$0]  %s39, 256, %s41, [#allocation5], 128, 128, 8
    $region25: #{mapping_forward.1} parent=1 // pred_fallthru
      _
    // Predicated region
    $region26: #{mapping_forward.1} parent=1 // pred_check
      _
    $region27: #{mapping_forward.1} parent=1 // pred_check_branch
      %48 = sbr.rel (0) target = $region29
    $region28: #{mapping_forward.1} parent=1 // pred_region
      %50 = vsyncadd [#allocation5], 0
      %s51 = sshll.u32 %s6, 4
      %s52 = int_to_ptr.hbm [resolvable:$true] %s51
      %s53 = sshll.u32 [#allocation6], 4
      %s54 = int_to_ptr.vmem [resolvable:$true] %s53
      %59 = dma.hbm_to_vmem [thread:$0]  %s52, 512, %s54, [#allocation5], 128, 128, 8
    $region29: #{mapping_forward.1} parent=1 // pred_fallthru
      _
    // Predicated region
    $region30: #{mapping_forward.1} parent=1 // pred_check
      _
    $region31: #{mapping_forward.1} parent=1 // pred_check_branch
      %61 = sbr.rel (0) target = $region33
    $region32: #{mapping_forward.1} parent=1 // pred_region
      _
    $region33: #{mapping_forward.1} parent=1 // pred_fallthru
      _
    // Predicated region
    $region34: #{mapping_forward.1} parent=1 // pred_check
      _
    $region35: #{mapping_forward.1} parent=1 // pred_check_branch
      %63 = sbr.rel (0) target = $region37
    $region36: #{mapping_forward.1} parent=1 // pred_region
      %65 = dma.done [#allocation3], 128
    $region37: #{mapping_forward.1} parent=1 // pred_fallthru
      _
    // Predicated region
    $region38: #{mapping_forward.1} parent=1 // pred_check
      _
    $region39: #{mapping_forward.1} parent=1 // pred_check_branch
      %67 = sbr.rel (0) target = $region41
    $region40: #{mapping_forward.1} parent=1 // pred_region
      %69 = dma.done [#allocation5], 256
    $region41: #{mapping_forward.1} parent=1 // pred_fallthru
      _
    // Predicated region
    $region42: #{mapping_forward.1} parent=1 // pred_check
      _
    $region43: #{mapping_forward.1} parent=1 // pred_check_branch
      %71 = sbr.rel (0) target = $region45
    $region44: #{mapping_forward.1} parent=1 // pred_region
      %73 = dma.done [#allocation5], 512
    $region45: #{mapping_forward.1} parent=1 // pred_fallthru
      _
    %v74 = vld [vmem:[#allocation2] sm:$0xff]
    %v75 = vld [vmem:[%s1] sm:$0xff]
    %v76 = vld [vmem:[%s1 + $0x8] sm:$0xff]
    %v77 = vld [vmem:[%s1 + $0x10] sm:$0xff]
    %v78 = vld [vmem:[%s1 + $0x18] sm:$0xff]
    %v79 = vld [vmem:[%s2] sm:$0xff]
    %v80 = vld [vmem:[%s2 + $0x8] sm:$0xff]
    %v81 = vld [vmem:[%s2 + $0x10] sm:$0xff]
    %v82 = vld [vmem:[%s2 + $0x18] sm:$0xff]
    %v83 = vld [vmem:[%s3] sm:$0xff]
    %v84 = vld [vmem:[%s3 + $0x8] sm:$0xff]
    %v85 = vld [vmem:[%s3 + $0x10] sm:$0xff]
    %v86 = vld [vmem:[%s3 + $0x18] sm:$0xff]
    %v87 = vld [vmem:[%s4] sm:$0xff]
    %v88 = vld [vmem:[%s4 + $0x8] sm:$0xff]
    %v89 = vld [vmem:[%s4 + $0x10] sm:$0xff]
    %v90 = vld [vmem:[%s4 + $0x18] sm:$0xff]
    %v91 = vld [vmem:[%s4 + $0x20] sm:$0xff]
    %v92 = vld [vmem:[%s4 + $0x28] sm:$0xff]
    %v93 = vld [vmem:[%s4 + $0x30] sm:$0xff]
    %v94 = vld [vmem:[%s4 + $0x38] sm:$0xff]
    %v95 = vld [vmem:[#allocation4] sm:$0xff]
    %v96 = vperm.slane %v95, 0
    %vm97 = vcmask 261120
    %v99 = vsel %vm97, %v74, 0
    %101 = vmatpush.msra.mxu0 0.0
    %102 = vmatpush.msra.mxu0 0.0
    %103 = vmatpush.msra.mxu0 0.0
    %104 = vmatpush.msra.mxu0 0.0
    %105 = vmatpush.msra.mxu0 0.0
    %106 = vmatpush.msra.mxu0 0.0
    %107 = vmatpush.msra.mxu0 0.0
    %108 = vmatpush.msra.mxu0 0.0
    %109 = vmatpush.msra.mxu0 0.0
    %110 = vmatpush.msra.mxu0 0.0
    %111 = vmatpush.msra.mxu0 0.0
    %112 = vmatpush.msra.mxu0 0.0
    %113 = vmatpush.msra.mxu0 %v78
    %114 = vmatpush.msra.mxu0 %v77
    %115 = vmatpush.msra.mxu0 %v76
    %116 = vmatpush.msra.mxu0 %v75
    %117 = vmatmul.f32.gmra.mxu0 %v99
    %v118 = vpop.f32.mrf.mxu0
    %v119 = vadd.f32 %v96, %v118
    %120 = vdwg.mxu0
    %122 = vrot.lane.b32.xlu0 %v119, 96
    %v123 = vpop.permute.xlu0 %122
    %vm124 = vcmask 64512
    %v125 = vsel %vm124, %v119, 0
    %v127 = vsel %vm124, %v123, 0
    %129 = vmatpush.xpose.msra.mxu0 0.0
    %130 = vmatpush.xpose.msra.mxu0 0.0
    %131 = vmatpush.xpose.msra.mxu0 0.0
    %132 = vmatpush.xpose.msra.mxu0 0.0
    %133 = vmatpush.xpose.msra.mxu0 0.0
    %134 = vmatpush.xpose.msra.mxu0 0.0
    %135 = vmatpush.xpose.msra.mxu0 0.0
    %136 = vmatpush.xpose.msra.mxu0 0.0
    %137 = vmatpush.xpose.msra.mxu0 0.0
    %138 = vmatpush.xpose.msra.mxu0 0.0
    %139 = vmatpush.xpose.msra.mxu0 0.0
    %140 = vmatpush.xpose.msra.mxu0 0.0
    %141 = vmatpush.xpose.msra.mxu0 0.0
    %142 = vmatpush.xpose.msra.mxu0 0.0
    %143 = vmatpush.xpose.msra.mxu0 0.0
    %144 = vmatpush.xpose.msra.mxu0 %v127
    %145 = vmatmul.f32.gmra.mxu0 %v125
    %v146 = vpop.f32.mrf.mxu0
    %v147 = vadd.f32 0.0, %v146
    %148 = vdwg.mxu0
    %149 = vrot.lane.b32.xlu0 %v119, 120
    %v150 = vpop.permute.xlu0 %149
    %151 = vrot.lane.b32.xlu0 %v119, 88
    %v152 = vpop.permute.xlu0 %151
    %v153 = vsel %vm124, %v150, 0
    %v155 = vsel %vm124, %v152, 0
    %157 = vmatpush.xpose.msra.mxu0 0.0
    %158 = vmatpush.xpose.msra.mxu0 0.0
    %159 = vmatpush.xpose.msra.mxu0 0.0
    %160 = vmatpush.xpose.msra.mxu0 0.0
    %161 = vmatpush.xpose.msra.mxu0 0.0
    %162 = vmatpush.xpose.msra.mxu0 0.0
    %163 = vmatpush.xpose.msra.mxu0 0.0
    %164 = vmatpush.xpose.msra.mxu0 0.0
    %165 = vmatpush.xpose.msra.mxu0 0.0
    %166 = vmatpush.xpose.msra.mxu0 0.0
    %167 = vmatpush.xpose.msra.mxu0 0.0
    %168 = vmatpush.xpose.msra.mxu0 0.0
    %169 = vmatpush.xpose.msra.mxu0 0.0
    %170 = vmatpush.xpose.msra.mxu0 0.0
    %171 = vmatpush.xpose.msra.mxu0 0.0
    %172 = vmatpush.xpose.msra.mxu0 %v155
    %173 = vmatmul.f32.gmra.mxu0 %v153
    %v174 = vpop.f32.mrf.mxu0
    %v175 = vadd.f32 0.0, %v174
    %176 = vdwg.mxu0
    %177 = vrot.lane.b32.xlu0 %v119, 112
    %v178 = vpop.permute.xlu0 %177
    %179 = vrot.lane.b32.xlu0 %v119, 80
    %v180 = vpop.permute.xlu0 %179
    %v181 = vsel %vm124, %v178, 0
    %v183 = vsel %vm124, %v180, 0
    %185 = vmatpush.xpose.msra.mxu0 0.0
    %186 = vmatpush.xpose.msra.mxu0 0.0
    %187 = vmatpush.xpose.msra.mxu0 0.0
    %188 = vmatpush.xpose.msra.mxu0 0.0
    %189 = vmatpush.xpose.msra.mxu0 0.0
    %190 = vmatpush.xpose.msra.mxu0 0.0
    %191 = vmatpush.xpose.msra.mxu0 0.0
    %192 = vmatpush.xpose.msra.mxu0 0.0
    %193 = vmatpush.xpose.msra.mxu0 0.0
    %194 = vmatpush.xpose.msra.mxu0 0.0
    %195 = vmatpush.xpose.msra.mxu0 0.0
    %196 = vmatpush.xpose.msra.mxu0 0.0
    %197 = vmatpush.xpose.msra.mxu0 0.0
    %198 = vmatpush.xpose.msra.mxu0 0.0
    %199 = vmatpush.xpose.msra.mxu0 0.0
    %200 = vmatpush.xpose.msra.mxu0 %v183
    %201 = vmatmul.f32.gmra.mxu0 %v181
    %v202 = vpop.f32.mrf.mxu0
    %v203 = vadd.f32 0.0, %v202
    %204 = vdwg.mxu0
    %205 = vrot.lane.b32.xlu0 %v119, 104
    %v206 = vpop.permute.xlu0 %205
    %207 = vrot.lane.b32.xlu0 %v119, 72
    %v208 = vpop.permute.xlu0 %207
    %v209 = vsel %vm124, %v206, 0
    %v211 = vsel %vm124, %v208, 0
    %213 = vmatpush.xpose.msra.mxu0 0.0
    %214 = vmatpush.xpose.msra.mxu0 0.0
    %215 = vmatpush.xpose.msra.mxu0 0.0
    %216 = vmatpush.xpose.msra.mxu0 0.0
    %217 = vmatpush.xpose.msra.mxu0 0.0
    %218 = vmatpush.xpose.msra.mxu0 0.0
    %219 = vmatpush.xpose.msra.mxu0 0.0
    %220 = vmatpush.xpose.msra.mxu0 0.0
    %221 = vmatpush.xpose.msra.mxu0 0.0
    %222 = vmatpush.xpose.msra.mxu0 0.0
    %223 = vmatpush.xpose.msra.mxu0 0.0
    %224 = vmatpush.xpose.msra.mxu0 0.0
    %225 = vmatpush.xpose.msra.mxu0 0.0
    %226 = vmatpush.xpose.msra.mxu0 0.0
    %227 = vmatpush.xpose.msra.mxu0 0.0
    %228 = vmatpush.xpose.msra.mxu0 %v211
    %229 = vmatmul.f32.gmra.mxu0 %v209
    %v230 = vpop.f32.mrf.mxu0
    %v231 = vadd.f32 0.0, %v230
    %232 = vdwg.mxu0
    %v233 = vsel %vm124, %v147, -inf
    %234 = vmax.xlane.f32.xlu0 %v233
    %v235 = vpop.xlane.xlu0 %234
    %v236 = vsel %vm124, %v175, -inf
    %237 = vmax.xlane.f32.xlu0 %v236
    %v238 = vpop.xlane.xlu0 %237
    %v239 = vsel %vm124, %v203, -inf
    %240 = vmax.xlane.f32.xlu0 %v239
    %v241 = vpop.xlane.xlu0 %240
    %v242 = vsel %vm124, %v231, -inf
    %243 = vmax.xlane.f32.xlu0 %v242
    %v244 = vpop.xlane.xlu0 %243
    %v245 = vsub.f32 %v147, %v235
    %v246 = vsub.f32 %v175, %v238
    %v247 = vsub.f32 %v203, %v241
    %v248 = vsub.f32 %v231, %v244
    %v249 = vmul.f32 %v245, 1.442695
    %v250 = vpow.pop %v249
    %v251 = vmul.f32 %v246, 1.442695
    %v252 = vpow.pop %v251
    %v253 = vmul.f32 %v247, 1.442695
    %v254 = vpow.pop %v253
    %v255 = vmul.f32 %v248, 1.442695
    %v256 = vpow.pop %v255
    %v257 = vsel %vm124, %v250, 0.0
    %258 = vadd.xlane.f32.xlu0 %v257
    %v259 = vpop.xlane.xlu0 %258
    %v260 = vsel %vm124, %v252, 0.0
    %261 = vadd.xlane.f32.xlu0 %v260
    %v262 = vpop.xlane.xlu0 %261
    %v263 = vsel %vm124, %v254, 0.0
    %264 = vadd.xlane.f32.xlu0 %v263
    %v265 = vpop.xlane.xlu0 %264
    %v266 = vsel %vm124, %v256, 0.0
    %267 = vadd.xlane.f32.xlu0 %v266
    %v268 = vpop.xlane.xlu0 %267
    %v269 = vrcp.pop %v259
    %v270 = vrcp.pop %v262
    %v271 = vrcp.pop %v265
    %v272 = vrcp.pop %v268
    %v273 = vmul.f32 %v250, %v269
    %v274 = vmul.f32 %v252, %v270
    %v275 = vmul.f32 %v254, %v271
    %v276 = vmul.f32 %v256, %v272
    %277 = vrot.lane.b32.xlu0 %v119, 64
    %v278 = vpop.permute.xlu0 %277
    %v281 = vsel %vm124, %v273, 0
    %283 = vmatpush.msra.mxu0 0.0
    %284 = vmatpush.msra.mxu0 0.0
    %285 = vmatpush.msra.mxu0 0.0
    %286 = vmatpush.msra.mxu0 0.0
    %287 = vmatpush.msra.mxu0 0.0
    %288 = vmatpush.msra.mxu0 0.0
    %289 = vmatpush.msra.mxu0 0.0
    %290 = vmatpush.msra.mxu0 0.0
    %291 = vmatpush.msra.mxu0 0.0
    %292 = vmatpush.msra.mxu0 0.0
    %293 = vmatpush.msra.mxu0 0.0
    %294 = vmatpush.msra.mxu0 0.0
    %295 = vmatpush.msra.mxu0 0.0
    %296 = vmatpush.msra.mxu0 0.0
    %297 = vmatpush.msra.mxu0 0.0
    %298 = vmatpush.msra.mxu0 %v278
    %299 = vmatmul.f32.gmra.mxu0 %v281
    %v300 = vpop.f32.mrf.mxu0
    %v301 = vadd.f32 0.0, %v300
    %302 = vdwg.mxu0
    %303 = vrot.lane.b32.xlu0 %v119, 56
    %v304 = vpop.permute.xlu0 %303
    %v307 = vsel %vm124, %v274, 0
    %309 = vmatpush.msra.mxu0 0.0
    %310 = vmatpush.msra.mxu0 0.0
    %311 = vmatpush.msra.mxu0 0.0
    %312 = vmatpush.msra.mxu0 0.0
    %313 = vmatpush.msra.mxu0 0.0
    %314 = vmatpush.msra.mxu0 0.0
    %315 = vmatpush.msra.mxu0 0.0
    %316 = vmatpush.msra.mxu0 0.0
    %317 = vmatpush.msra.mxu0 0.0
    %318 = vmatpush.msra.mxu0 0.0
    %319 = vmatpush.msra.mxu0 0.0
    %320 = vmatpush.msra.mxu0 0.0
    %321 = vmatpush.msra.mxu0 0.0
    %322 = vmatpush.msra.mxu0 0.0
    %323 = vmatpush.msra.mxu0 0.0
    %324 = vmatpush.msra.mxu0 %v304
    %325 = vmatmul.f32.gmra.mxu0 %v307
    %v326 = vpop.f32.mrf.mxu0
    %v327 = vadd.f32 0.0, %v326
    %328 = vdwg.mxu0
    %329 = vrot.lane.b32.xlu0 %v119, 48
    %v330 = vpop.permute.xlu0 %329
    %v333 = vsel %vm124, %v275, 0
    %335 = vmatpush.msra.mxu0 0.0
    %336 = vmatpush.msra.mxu0 0.0
    %337 = vmatpush.msra.mxu0 0.0
    %338 = vmatpush.msra.mxu0 0.0
    %339 = vmatpush.msra.mxu0 0.0
    %340 = vmatpush.msra.mxu0 0.0
    %341 = vmatpush.msra.mxu0 0.0
    %342 = vmatpush.msra.mxu0 0.0
    %343 = vmatpush.msra.mxu0 0.0
    %344 = vmatpush.msra.mxu0 0.0
    %345 = vmatpush.msra.mxu0 0.0
    %346 = vmatpush.msra.mxu0 0.0
    %347 = vmatpush.msra.mxu0 0.0
    %348 = vmatpush.msra.mxu0 0.0
    %349 = vmatpush.msra.mxu0 0.0
    %350 = vmatpush.msra.mxu0 %v330
    %351 = vmatmul.f32.gmra.mxu0 %v333
    %v352 = vpop.f32.mrf.mxu0
    %v353 = vadd.f32 0.0, %v352
    %354 = vdwg.mxu0
    %355 = vrot.lane.b32.xlu0 %v119, 40
    %v356 = vpop.permute.xlu0 %355
    %v359 = vsel %vm124, %v276, 0
    %361 = vmatpush.msra.mxu0 0.0
    %362 = vmatpush.msra.mxu0 0.0
    %363 = vmatpush.msra.mxu0 0.0
    %364 = vmatpush.msra.mxu0 0.0
    %365 = vmatpush.msra.mxu0 0.0
    %366 = vmatpush.msra.mxu0 0.0
    %367 = vmatpush.msra.mxu0 0.0
    %368 = vmatpush.msra.mxu0 0.0
    %369 = vmatpush.msra.mxu0 0.0
    %370 = vmatpush.msra.mxu0 0.0
    %371 = vmatpush.msra.mxu0 0.0
    %372 = vmatpush.msra.mxu0 0.0
    %373 = vmatpush.msra.mxu0 0.0
    %374 = vmatpush.msra.mxu0 0.0
    %375 = vmatpush.msra.mxu0 0.0
    %376 = vmatpush.msra.mxu0 %v356
    %377 = vmatmul.f32.gmra.mxu0 %v359
    %v378 = vpop.f32.mrf.mxu0
    %v379 = vadd.f32 0.0, %v378
    %380 = vdwg.mxu0
    %382 = vrot.lane.b32.xlu0 %v327, 8
    %v383 = vpop.permute.xlu0 %382
    %386 = vrot.lane.b32.xlu0 %v353, 16
    %v387 = vpop.permute.xlu0 %386
    %390 = vrot.lane.b32.xlu0 %v379, 24
    %v391 = vpop.permute.xlu0 %390
    %v393 = vsel %vm124, %v301, %v383
    %vm394 = vcmask 130048
    %v395 = vsel %vm394, %v393, %v387
    %vm396 = vcmask 195584
    %v397 = vsel %vm396, %v395, %v391
    %v398 = vperm.slane %v95, 1
    %v400 = vsel %vm97, %v397, 0
    %402 = vmatpush.msra.mxu0 0.0
    %403 = vmatpush.msra.mxu0 0.0
    %404 = vmatpush.msra.mxu0 0.0
    %405 = vmatpush.msra.mxu0 0.0
    %406 = vmatpush.msra.mxu0 0.0
    %407 = vmatpush.msra.mxu0 0.0
    %408 = vmatpush.msra.mxu0 0.0
    %409 = vmatpush.msra.mxu0 0.0
    %410 = vmatpush.msra.mxu0 0.0
    %411 = vmatpush.msra.mxu0 0.0
    %412 = vmatpush.msra.mxu0 0.0
    %413 = vmatpush.msra.mxu0 0.0
    %414 = vmatpush.msra.mxu0 %v82
    %415 = vmatpush.msra.mxu0 %v81
    %416 = vmatpush.msra.mxu0 %v80
    %417 = vmatpush.msra.mxu0 %v79
    %418 = vmatmul.f32.gmra.mxu0 %v400
    %v419 = vpop.f32.mrf.mxu0
    %v420 = vadd.f32 %v398, %v419
    %421 = vdwg.mxu0
    %v422 = vadd.f32 %v74, %v420
    %v423 = vsel %vm97, %v422, 0.0
    %424 = vadd.xlane.f32.xlu0 %v423
    %v425 = vpop.xlane.xlu0 %424
    %v426 = vrcp.pop 32.0
    %v427 = vmul.f32 32.0, %v426
    %v428 = vsub.f32 1.0, %v427
    %v429 = vmul.f32 %v426, %v428
    %v430 = vadd.f32 %v426, %v429
    %vm431 = vweird.f32 %v426
    %v432 = vsel %vm431, %v426, %v430
    %v433 = vmul.f32 %v425, %v432
    %v434 = vsub.f32 %v422, %v433
    %v435 = vmul.f32 %v434, %v434
    %v436 = vsel %vm97, %v435, 0.0
    %437 = vadd.xlane.f32.xlu0 %v436
    %v438 = vpop.xlane.xlu0 %437
    %v439 = vmul.f32 %v438, %v432
    %v440 = vadd.f32 %v439, 1e-05
    %v441 = vrsqrt.pop %v440
    %v442 = vmul.f32 %v441, %v440
    %v443 = vmul.f32 %v442, %v441
    %v444 = vmul.f32 0.5, %v443
    %v445 = vsub.f32 1.5, %v444
    %v446 = vmul.f32 %v441, %v445
    %vm447 = vweird.f32 %v440
    %vm448 = vweird.f32 %v441
    %vm449 = vmor %vm447, %vm448
    %v450 = vsel %vm449, %v441, %v446
    %v451 = vmul.f32 %v434, %v450
    %v452 = vperm.slane %v95, 4
    %v453 = vmul.f32 %v451, %v452
    %v454 = vperm.slane %v95, 5
    %v455 = vadd.f32 %v453, %v454
    %v456 = vperm.slane %v95, 2
    %v458 = vsel %vm97, %v455, 0
    %460 = vmatpush.msra.mxu0 0.0
    %461 = vmatpush.msra.mxu0 0.0
    %462 = vmatpush.msra.mxu0 0.0
    %463 = vmatpush.msra.mxu0 0.0
    %464 = vmatpush.msra.mxu0 0.0
    %465 = vmatpush.msra.mxu0 0.0
    %466 = vmatpush.msra.mxu0 0.0
    %467 = vmatpush.msra.mxu0 0.0
    %468 = vmatpush.msra.mxu0 0.0
    %469 = vmatpush.msra.mxu0 0.0
    %470 = vmatpush.msra.mxu0 0.0
    %471 = vmatpush.msra.mxu0 0.0
    %472 = vmatpush.msra.mxu0 %v86
    %473 = vmatpush.msra.mxu0 %v85
    %474 = vmatpush.msra.mxu0 %v84
    %475 = vmatpush.msra.mxu0 %v83
    %476 = vmatmul.f32.gmra.mxu0 %v458
    %v477 = vpop.f32.mrf.mxu0
    %v478 = vadd.f32 %v456, %v477
    %479 = vdwg.mxu0
    %v480 = vmax.f32 %v478, 0.0
    %v481 = vperm.slane %v95, 3
    %vm482 = vcmask 523264
    %v484 = vsel %vm482, %v480, 0
    %486 = vmatpush.msra.mxu0 0.0
    %487 = vmatpush.msra.mxu0 0.0
    %488 = vmatpush.msra.mxu0 0.0
    %489 = vmatpush.msra.mxu0 0.0
    %490 = vmatpush.msra.mxu0 0.0
    %491 = vmatpush.msra.mxu0 0.0
    %492 = vmatpush.msra.mxu0 0.0
    %493 = vmatpush.msra.mxu0 0.0
    %494 = vmatpush.msra.mxu0 %v94
    %495 = vmatpush.msra.mxu0 %v93
    %496 = vmatpush.msra.mxu0 %v92
    %497 = vmatpush.msra.mxu0 %v91
    %498 = vmatpush.msra.mxu0 %v90
    %499 = vmatpush.msra.mxu0 %v89
    %500 = vmatpush.msra.mxu0 %v88
    %501 = vmatpush.msra.mxu0 %v87
    %502 = vmatmul.f32.gmra.mxu0 %v484
    %v503 = vpop.f32.mrf.mxu0
    %v504 = vadd.f32 %v481, %v503
    %505 = vdwg.mxu0
    %v506 = vadd.f32 %v455, %v504
    %v507 = vsel %vm97, %v506, 0.0
    %508 = vadd.xlane.f32.xlu0 %v507
    %v509 = vpop.xlane.xlu0 %508
    %v510 = vmul.f32 %v509, %v432
    %v511 = vsub.f32 %v506, %v510
    %v512 = vmul.f32 %v511, %v511
    %v513 = vsel %vm97, %v512, 0.0
    %514 = vadd.xlane.f32.xlu0 %v513
    %v515 = vpop.xlane.xlu0 %514
    %v516 = vmul.f32 %v515, %v432
    %v517 = vadd.f32 %v516, 1e-05
    %v518 = vrsqrt.pop %v517
    %v519 = vmul.f32 %v518, %v517
    %v520 = vmul.f32 %v519, %v518
    %v521 = vmul.f32 0.5, %v520
    %v522 = vsub.f32 1.5, %v521
    %v523 = vmul.f32 %v518, %v522
    %vm524 = vweird.f32 %v517
    %vm525 = vweird.f32 %v518
    %vm526 = vmor %vm524, %vm525
    %v527 = vsel %vm526, %v518, %v523
    %v528 = vmul.f32 %v511, %v527
    %v529 = vperm.slane %v95, 6
    %v530 = vmul.f32 %v528, %v529
    %v531 = vperm.slane %v95, 7
    %v532 = vadd.f32 %v530, %v531
    %s533 = scalar_lea.vmem %s1, 32
    %v534 = vld [vmem:[%s533] sm:$0xff]
    %v535 = vld [vmem:[%s533 + $0x8] sm:$0xff]
    %v536 = vld [vmem:[%s533 + $0x10] sm:$0xff]
    %v537 = vld [vmem:[%s533 + $0x18] sm:$0xff]
    %s538 = scalar_lea.vmem %s2, 32
    %v539 = vld [vmem:[%s538] sm:$0xff]
    %v540 = vld [vmem:[%s538 + $0x8] sm:$0xff]
    %v541 = vld [vmem:[%s538 + $0x10] sm:$0xff]
    %v542 = vld [vmem:[%s538 + $0x18] sm:$0xff]
    %s543 = scalar_lea.vmem %s3, 32
    %v544 = vld [vmem:[%s543] sm:$0xff]
    %v545 = vld [vmem:[%s543 + $0x8] sm:$0xff]
    %v546 = vld [vmem:[%s543 + $0x10] sm:$0xff]
    %v547 = vld [vmem:[%s543 + $0x18] sm:$0xff]
    %s548 = scalar_lea.vmem %s4, 64
    %v549 = vld [vmem:[%s548] sm:$0xff]
    %v550 = vld [vmem:[%s548 + $0x8] sm:$0xff]
    %v551 = vld [vmem:[%s548 + $0x10] sm:$0xff]
    %v552 = vld [vmem:[%s548 + $0x18] sm:$0xff]
    %v553 = vld [vmem:[%s548 + $0x20] sm:$0xff]
    %v554 = vld [vmem:[%s548 + $0x28] sm:$0xff]
    %v555 = vld [vmem:[%s548 + $0x30] sm:$0xff]
    %v556 = vld [vmem:[%s548 + $0x38] sm:$0xff]
    %s557 = scalar_lea.vmem [#allocation4], 8
    %v558 = vld [vmem:[%s557] sm:$0xff]
    %v559 = vperm.slane %v558, 0
    %v561 = vsel %vm97, %v532, 0
    %563 = vmatpush.msra.mxu0 0.0
    %564 = vmatpush.msra.mxu0 0.0
    %565 = vmatpush.msra.mxu0 0.0
    %566 = vmatpush.msra.mxu0 0.0
    %567 = vmatpush.msra.mxu0 0.0
    %568 = vmatpush.msra.mxu0 0.0
    %569 = vmatpush.msra.mxu0 0.0
    %570 = vmatpush.msra.mxu0 0.0
    %571 = vmatpush.msra.mxu0 0.0
    %572 = vmatpush.msra.mxu0 0.0
    %573 = vmatpush.msra.mxu0 0.0
    %574 = vmatpush.msra.mxu0 0.0
    %575 = vmatpush.msra.mxu0 %v537
    %576 = vmatpush.msra.mxu0 %v536
    %577 = vmatpush.msra.mxu0 %v535
    %578 = vmatpush.msra.mxu0 %v534
    %579 = vmatmul.f32.gmra.mxu0 %v561
    %v580 = vpop.f32.mrf.mxu0
    %v581 = vadd.f32 %v559, %v580
    %582 = vdwg.mxu0
    %584 = vrot.lane.b32.xlu0 %v581, 96
    %v585 = vpop.permute.xlu0 %584
    %v586 = vsel %vm124, %v581, 0
    %v588 = vsel %vm124, %v585, 0
    %590 = vmatpush.xpose.msra.mxu0 0.0
    %591 = vmatpush.xpose.msra.mxu0 0.0
    %592 = vmatpush.xpose.msra.mxu0 0.0
    %593 = vmatpush.xpose.msra.mxu0 0.0
    %594 = vmatpush.xpose.msra.mxu0 0.0
    %595 = vmatpush.xpose.msra.mxu0 0.0
    %596 = vmatpush.xpose.msra.mxu0 0.0
    %597 = vmatpush.xpose.msra.mxu0 0.0
    %598 = vmatpush.xpose.msra.mxu0 0.0
    %599 = vmatpush.xpose.msra.mxu0 0.0
    %600 = vmatpush.xpose.msra.mxu0 0.0
    %601 = vmatpush.xpose.msra.mxu0 0.0
    %602 = vmatpush.xpose.msra.mxu0 0.0
    %603 = vmatpush.xpose.msra.mxu0 0.0
    %604 = vmatpush.xpose.msra.mxu0 0.0
    %605 = vmatpush.xpose.msra.mxu0 %v588
    %606 = vmatmul.f32.gmra.mxu0 %v586
    %v607 = vpop.f32.mrf.mxu0
    %v608 = vadd.f32 0.0, %v607
    %609 = vdwg.mxu0
    %610 = vrot.lane.b32.xlu0 %v581, 120
    %v611 = vpop.permute.xlu0 %610
    %612 = vrot.lane.b32.xlu0 %v581, 88
    %v613 = vpop.permute.xlu0 %612
    %v614 = vsel %vm124, %v611, 0
    %v616 = vsel %vm124, %v613, 0
    %618 = vmatpush.xpose.msra.mxu0 0.0
    %619 = vmatpush.xpose.msra.mxu0 0.0
    %620 = vmatpush.xpose.msra.mxu0 0.0
    %621 = vmatpush.xpose.msra.mxu0 0.0
    %622 = vmatpush.xpose.msra.mxu0 0.0
    %623 = vmatpush.xpose.msra.mxu0 0.0
    %624 = vmatpush.xpose.msra.mxu0 0.0
    %625 = vmatpush.xpose.msra.mxu0 0.0
    %626 = vmatpush.xpose.msra.mxu0 0.0
    %627 = vmatpush.xpose.msra.mxu0 0.0
    %628 = vmatpush.xpose.msra.mxu0 0.0
    %629 = vmatpush.xpose.msra.mxu0 0.0
    %630 = vmatpush.xpose.msra.mxu0 0.0
    %631 = vmatpush.xpose.msra.mxu0 0.0
    %632 = vmatpush.xpose.msra.mxu0 0.0
    %633 = vmatpush.xpose.msra.mxu0 %v616
    %634 = vmatmul.f32.gmra.mxu0 %v614
    %v635 = vpop.f32.mrf.mxu0
    %v636 = vadd.f32 0.0, %v635
    %637 = vdwg.mxu0
    %638 = vrot.lane.b32.xlu0 %v581, 112
    %v639 = vpop.permute.xlu0 %638
    %640 = vrot.lane.b32.xlu0 %v581, 80
    %v641 = vpop.permute.xlu0 %640
    %v642 = vsel %vm124, %v639, 0
    %v644 = vsel %vm124, %v641, 0
    %646 = vmatpush.xpose.msra.mxu0 0.0
    %647 = vmatpush.xpose.msra.mxu0 0.0
    %648 = vmatpush.xpose.msra.mxu0 0.0
    %649 = vmatpush.xpose.msra.mxu0 0.0
    %650 = vmatpush.xpose.msra.mxu0 0.0
    %651 = vmatpush.xpose.msra.mxu0 0.0
    %652 = vmatpush.xpose.msra.mxu0 0.0
    %653 = vmatpush.xpose.msra.mxu0 0.0
    %654 = vmatpush.xpose.msra.mxu0 0.0
    %655 = vmatpush.xpose.msra.mxu0 0.0
    %656 = vmatpush.xpose.msra.mxu0 0.0
    %657 = vmatpush.xpose.msra.mxu0 0.0
    %658 = vmatpush.xpose.msra.mxu0 0.0
    %659 = vmatpush.xpose.msra.mxu0 0.0
    %660 = vmatpush.xpose.msra.mxu0 0.0
    %661 = vmatpush.xpose.msra.mxu0 %v644
    %662 = vmatmul.f32.gmra.mxu0 %v642
    %v663 = vpop.f32.mrf.mxu0
    %v664 = vadd.f32 0.0, %v663
    %665 = vdwg.mxu0
    %666 = vrot.lane.b32.xlu0 %v581, 104
    %v667 = vpop.permute.xlu0 %666
    %668 = vrot.lane.b32.xlu0 %v581, 72
    %v669 = vpop.permute.xlu0 %668
    %v670 = vsel %vm124, %v667, 0
    %v672 = vsel %vm124, %v669, 0
    %674 = vmatpush.xpose.msra.mxu0 0.0
    %675 = vmatpush.xpose.msra.mxu0 0.0
    %676 = vmatpush.xpose.msra.mxu0 0.0
    %677 = vmatpush.xpose.msra.mxu0 0.0
    %678 = vmatpush.xpose.msra.mxu0 0.0
    %679 = vmatpush.xpose.msra.mxu0 0.0
    %680 = vmatpush.xpose.msra.mxu0 0.0
    %681 = vmatpush.xpose.msra.mxu0 0.0
    %682 = vmatpush.xpose.msra.mxu0 0.0
    %683 = vmatpush.xpose.msra.mxu0 0.0
    %684 = vmatpush.xpose.msra.mxu0 0.0
    %685 = vmatpush.xpose.msra.mxu0 0.0
    %686 = vmatpush.xpose.msra.mxu0 0.0
    %687 = vmatpush.xpose.msra.mxu0 0.0
    %688 = vmatpush.xpose.msra.mxu0 0.0
    %689 = vmatpush.xpose.msra.mxu0 %v672
    %690 = vmatmul.f32.gmra.mxu0 %v670
    %v691 = vpop.f32.mrf.mxu0
    %v692 = vadd.f32 0.0, %v691
    %693 = vdwg.mxu0
    %v694 = vsel %vm124, %v608, -inf
    %695 = vmax.xlane.f32.xlu0 %v694
    %v696 = vpop.xlane.xlu0 %695
    %v697 = vsel %vm124, %v636, -inf
    %698 = vmax.xlane.f32.xlu0 %v697
    %v699 = vpop.xlane.xlu0 %698
    %v700 = vsel %vm124, %v664, -inf
    %701 = vmax.xlane.f32.xlu0 %v700
    %v702 = vpop.xlane.xlu0 %701
    %v703 = vsel %vm124, %v692, -inf
    %704 = vmax.xlane.f32.xlu0 %v703
    %v705 = vpop.xlane.xlu0 %704
    %v706 = vsub.f32 %v608, %v696
    %v707 = vsub.f32 %v636, %v699
    %v708 = vsub.f32 %v664, %v702
    %v709 = vsub.f32 %v692, %v705
    %v710 = vmul.f32 %v706, 1.442695
    %v711 = vpow.pop %v710
    %v712 = vmul.f32 %v707, 1.442695
    %v713 = vpow.pop %v712
    %v714 = vmul.f32 %v708, 1.442695
    %v715 = vpow.pop %v714
    %v716 = vmul.f32 %v709, 1.442695
    %v717 = vpow.pop %v716
    %v718 = vsel %vm124, %v711, 0.0
    %719 = vadd.xlane.f32.xlu0 %v718
    %v720 = vpop.xlane.xlu0 %719
    %v721 = vsel %vm124, %v713, 0.0
    %722 = vadd.xlane.f32.xlu0 %v721
    %v723 = vpop.xlane.xlu0 %722
    %v724 = vsel %vm124, %v715, 0.0
    %725 = vadd.xlane.f32.xlu0 %v724
    %v726 = vpop.xlane.xlu0 %725
    %v727 = vsel %vm124, %v717, 0.0
    %728 = vadd.xlane.f32.xlu0 %v727
    %v729 = vpop.xlane.xlu0 %728
    %v730 = vrcp.pop %v720
    %v731 = vrcp.pop %v723
    %v732 = vrcp.pop %v726
    %v733 = vrcp.pop %v729
    %v734 = vmul.f32 %v711, %v730
    %v735 = vmul.f32 %v713, %v731
    %v736 = vmul.f32 %v715, %v732
    %v737 = vmul.f32 %v717, %v733
    %738 = vrot.lane.b32.xlu0 %v581, 64
    %v739 = vpop.permute.xlu0 %738
    %v742 = vsel %vm124, %v734, 0
    %744 = vmatpush.msra.mxu0 0.0
    %745 = vmatpush.msra.mxu0 0.0
    %746 = vmatpush.msra.mxu0 0.0
    %747 = vmatpush.msra.mxu0 0.0
    %748 = vmatpush.msra.mxu0 0.0
    %749 = vmatpush.msra.mxu0 0.0
    %750 = vmatpush.msra.mxu0 0.0
    %751 = vmatpush.msra.mxu0 0.0
    %752 = vmatpush.msra.mxu0 0.0
    %753 = vmatpush.msra.mxu0 0.0
    %754 = vmatpush.msra.mxu0 0.0
    %755 = vmatpush.msra.mxu0 0.0
    %756 = vmatpush.msra.mxu0 0.0
    %757 = vmatpush.msra.mxu0 0.0
    %758 = vmatpush.msra.mxu0 0.0
    %759 = vmatpush.msra.mxu0 %v739
    %760 = vmatmul.f32.gmra.mxu0 %v742
    %v761 = vpop.f32.mrf.mxu0
    %v762 = vadd.f32 0.0, %v761
    %763 = vdwg.mxu0
    %764 = vrot.lane.b32.xlu0 %v581, 56
    %v765 = vpop.permute.xlu0 %764
    %v768 = vsel %vm124, %v735, 0
    %770 = vmatpush.msra.mxu0 0.0
    %771 = vmatpush.msra.mxu0 0.0
    %772 = vmatpush.msra.mxu0 0.0
    %773 = vmatpush.msra.mxu0 0.0
    %774 = vmatpush.msra.mxu0 0.0
    %775 = vmatpush.msra.mxu0 0.0
    %776 = vmatpush.msra.mxu0 0.0
    %777 = vmatpush.msra.mxu0 0.0
    %778 = vmatpush.msra.mxu0 0.0
    %779 = vmatpush.msra.mxu0 0.0
    %780 = vmatpush.msra.mxu0 0.0
    %781 = vmatpush.msra.mxu0 0.0
    %782 = vmatpush.msra.mxu0 0.0
    %783 = vmatpush.msra.mxu0 0.0
    %784 = vmatpush.msra.mxu0 0.0
    %785 = vmatpush.msra.mxu0 %v765
    %786 = vmatmul.f32.gmra.mxu0 %v768
    %v787 = vpop.f32.mrf.mxu0
    %v788 = vadd.f32 0.0, %v787
    %789 = vdwg.mxu0
    %790 = vrot.lane.b32.xlu0 %v581, 48
    %v791 = vpop.permute.xlu0 %790
    %v794 = vsel %vm124, %v736, 0
    %796 = vmatpush.msra.mxu0 0.0
    %797 = vmatpush.msra.mxu0 0.0
    %798 = vmatpush.msra.mxu0 0.0
    %799 = vmatpush.msra.mxu0 0.0
    %800 = vmatpush.msra.mxu0 0.0
    %801 = vmatpush.msra.mxu0 0.0
    %802 = vmatpush.msra.mxu0 0.0
    %803 = vmatpush.msra.mxu0 0.0
    %804 = vmatpush.msra.mxu0 0.0
    %805 = vmatpush.msra.mxu0 0.0
    %806 = vmatpush.msra.mxu0 0.0
    %807 = vmatpush.msra.mxu0 0.0
    %808 = vmatpush.msra.mxu0 0.0
    %809 = vmatpush.msra.mxu0 0.0
    %810 = vmatpush.msra.mxu0 0.0
    %811 = vmatpush.msra.mxu0 %v791
    %812 = vmatmul.f32.gmra.mxu0 %v794
    %v813 = vpop.f32.mrf.mxu0
    %v814 = vadd.f32 0.0, %v813
    %815 = vdwg.mxu0
    %816 = vrot.lane.b32.xlu0 %v581, 40
    %v817 = vpop.permute.xlu0 %816
    %v820 = vsel %vm124, %v737, 0
    %822 = vmatpush.msra.mxu0 0.0
    %823 = vmatpush.msra.mxu0 0.0
    %824 = vmatpush.msra.mxu0 0.0
    %825 = vmatpush.msra.mxu0 0.0
    %826 = vmatpush.msra.mxu0 0.0
    %827 = vmatpush.msra.mxu0 0.0
    %828 = vmatpush.msra.mxu0 0.0
    %829 = vmatpush.msra.mxu0 0.0
    %830 = vmatpush.msra.mxu0 0.0
    %831 = vmatpush.msra.mxu0 0.0
    %832 = vmatpush.msra.mxu0 0.0
    %833 = vmatpush.msra.mxu0 0.0
    %834 = vmatpush.msra.mxu0 0.0
    %835 = vmatpush.msra.mxu0 0.0
    %836 = vmatpush.msra.mxu0 0.0
    %837 = vmatpush.msra.mxu0 %v817
    %838 = vmatmul.f32.gmra.mxu0 %v820
    %v839 = vpop.f32.mrf.mxu0
    %v840 = vadd.f32 0.0, %v839
    %841 = vdwg.mxu0
    %843 = vrot.lane.b32.xlu0 %v788, 8
    %v844 = vpop.permute.xlu0 %843
    %847 = vrot.lane.b32.xlu0 %v814, 16
    %v848 = vpop.permute.xlu0 %847
    %851 = vrot.lane.b32.xlu0 %v840, 24
    %v852 = vpop.permute.xlu0 %851
    %v854 = vsel %vm124, %v762, %v844
    %v855 = vsel %vm394, %v854, %v848
    %v856 = vsel %vm396, %v855, %v852
    %v857 = vperm.slane %v558, 1
    %v859 = vsel %vm97, %v856, 0
    %861 = vmatpush.msra.mxu0 0.0
    %862 = vmatpush.msra.mxu0 0.0
    %863 = vmatpush.msra.mxu0 0.0
    %864 = vmatpush.msra.mxu0 0.0
    %865 = vmatpush.msra.mxu0 0.0
    %866 = vmatpush.msra.mxu0 0.0
    %867 = vmatpush.msra.mxu0 0.0
    %868 = vmatpush.msra.mxu0 0.0
    %869 = vmatpush.msra.mxu0 0.0
    %870 = vmatpush.msra.mxu0 0.0
    %871 = vmatpush.msra.mxu0 0.0
    %872 = vmatpush.msra.mxu0 0.0
    %873 = vmatpush.msra.mxu0 %v542
    %874 = vmatpush.msra.mxu0 %v541
    %875 = vmatpush.msra.mxu0 %v540
    %876 = vmatpush.msra.mxu0 %v539
    %877 = vmatmul.f32.gmra.mxu0 %v859
    %v878 = vpop.f32.mrf.mxu0
    %v879 = vadd.f32 %v857, %v878
    %880 = vdwg.mxu0
    %v881 = vadd.f32 %v532, %v879
    %v882 = vsel %vm97, %v881, 0.0
    %883 = vadd.xlane.f32.xlu0 %v882
    %v884 = vpop.xlane.xlu0 %883
    %v885 = vmul.f32 %v884, %v432
    %v886 = vsub.f32 %v881, %v885
    %v887 = vmul.f32 %v886, %v886
    %v888 = vsel %vm97, %v887, 0.0
    %889 = vadd.xlane.f32.xlu0 %v888
    %v890 = vpop.xlane.xlu0 %889
    %v891 = vmul.f32 %v890, %v432
    %v892 = vadd.f32 %v891, 1e-05
    %v893 = vrsqrt.pop %v892
    %v894 = vmul.f32 %v893, %v892
    %v895 = vmul.f32 %v894, %v893
    %v896 = vmul.f32 0.5, %v895
    %v897 = vsub.f32 1.5, %v896
    %v898 = vmul.f32 %v893, %v897
    %vm899 = vweird.f32 %v892
    %vm900 = vweird.f32 %v893
    %vm901 = vmor %vm899, %vm900
    %v902 = vsel %vm901, %v893, %v898
    %v903 = vmul.f32 %v886, %v902
    %v904 = vperm.slane %v558, 4
    %v905 = vmul.f32 %v903, %v904
    %v906 = vperm.slane %v558, 5
    %v907 = vadd.f32 %v905, %v906
    %v908 = vperm.slane %v558, 2
    %v910 = vsel %vm97, %v907, 0
    %912 = vmatpush.msra.mxu0 0.0
    %913 = vmatpush.msra.mxu0 0.0
    %914 = vmatpush.msra.mxu0 0.0
    %915 = vmatpush.msra.mxu0 0.0
    %916 = vmatpush.msra.mxu0 0.0
    %917 = vmatpush.msra.mxu0 0.0
    %918 = vmatpush.msra.mxu0 0.0
    %919 = vmatpush.msra.mxu0 0.0
    %920 = vmatpush.msra.mxu0 0.0
    %921 = vmatpush.msra.mxu0 0.0
    %922 = vmatpush.msra.mxu0 0.0
    %923 = vmatpush.msra.mxu0 0.0
    %924 = vmatpush.msra.mxu0 %v547
    %925 = vmatpush.msra.mxu0 %v546
    %926 = vmatpush.msra.mxu0 %v545
    %927 = vmatpush.msra.mxu0 %v544
    %928 = vmatmul.f32.gmra.mxu0 %v910
    %v929 = vpop.f32.mrf.mxu0
    %v930 = vadd.f32 %v908, %v929
    %931 = vdwg.mxu0
    %v932 = vmax.f32 %v930, 0.0
    %v933 = vperm.slane %v558, 3
    %v935 = vsel %vm482, %v932, 0
    %937 = vmatpush.msra.mxu0 0.0
    %938 = vmatpush.msra.mxu0 0.0
    %939 = vmatpush.msra.mxu0 0.0
    %940 = vmatpush.msra.mxu0 0.0
    %941 = vmatpush.msra.mxu0 0.0
    %942 = vmatpush.msra.mxu0 0.0
    %943 = vmatpush.msra.mxu0 0.0
    %944 = vmatpush.msra.mxu0 0.0
    %945 = vmatpush.msra.mxu0 %v556
    %946 = vmatpush.msra.mxu0 %v555
    %947 = vmatpush.msra.mxu0 %v554
    %948 = vmatpush.msra.mxu0 %v553
    %949 = vmatpush.msra.mxu0 %v552
    %950 = vmatpush.msra.mxu0 %v551
    %951 = vmatpush.msra.mxu0 %v550
    %952 = vmatpush.msra.mxu0 %v549
    %953 = vmatmul.f32.gmra.mxu0 %v935
    %v954 = vpop.f32.mrf.mxu0
    %v955 = vadd.f32 %v933, %v954
    %956 = vdwg.mxu0
    %v957 = vadd.f32 %v907, %v955
    %v958 = vsel %vm97, %v957, 0.0
    %959 = vadd.xlane.f32.xlu0 %v958
    %v960 = vpop.xlane.xlu0 %959
    %v961 = vmul.f32 %v960, %v432
    %v962 = vsub.f32 %v957, %v961
    %v963 = vmul.f32 %v962, %v962
    %v964 = vsel %vm97, %v963, 0.0
    %965 = vadd.xlane.f32.xlu0 %v964
    %v966 = vpop.xlane.xlu0 %965
    %v967 = vmul.f32 %v966, %v432
    %v968 = vadd.f32 %v967, 1e-05
    %v969 = vrsqrt.pop %v968
    %v970 = vmul.f32 %v969, %v968
    %v971 = vmul.f32 %v970, %v969
    %v972 = vmul.f32 0.5, %v971
    %v973 = vsub.f32 1.5, %v972
    %v974 = vmul.f32 %v969, %v973
    %vm975 = vweird.f32 %v968
    %vm976 = vweird.f32 %v969
    %vm977 = vmor %vm975, %vm976
    %v978 = vsel %vm977, %v969, %v974
    %v979 = vmul.f32 %v962, %v978
    %v980 = vperm.slane %v558, 6
    %v981 = vmul.f32 %v979, %v980
    %v982 = vperm.slane %v558, 7
    %v983 = vadd.f32 %v981, %v982
    %v984 = vld [vmem:[#allocation6] sm:$0xff]
    %v985 = vld [vmem:[#allocation6 + $0x8] sm:$0xff]
    %v986 = vld [vmem:[#allocation6 + $0x10] sm:$0xff]
    %v987 = vld [vmem:[#allocation6 + $0x18] sm:$0xff]
    %v988 = vld [vmem:[%s7] sm:$0x1]
    %v990 = vperm.slane %v988, 0
    %v993 = vsel %vm97, %v983, 0
    %995 = vmatpush.msra.mxu0 0.0
    %996 = vmatpush.msra.mxu0 0.0
    %997 = vmatpush.msra.mxu0 0.0
    %998 = vmatpush.msra.mxu0 0.0
    %999 = vmatpush.msra.mxu0 0.0
    %1000 = vmatpush.msra.mxu0 0.0
    %1001 = vmatpush.msra.mxu0 0.0
    %1002 = vmatpush.msra.mxu0 0.0
    %1003 = vmatpush.msra.mxu0 0.0
    %1004 = vmatpush.msra.mxu0 0.0
    %1005 = vmatpush.msra.mxu0 0.0
    %1006 = vmatpush.msra.mxu0 0.0
    %1007 = vmatpush.msra.mxu0 %v987
    %1008 = vmatpush.msra.mxu0 %v986
    %1009 = vmatpush.msra.mxu0 %v985
    %1010 = vmatpush.msra.mxu0 %v984
    %1011 = vmatmul.f32.gmra.mxu0 %v993
    %v1012 = vpop.f32.mrf.mxu0
    %v1013 = vadd.f32 %v990, %v1012
    %1014 = vdwg.mxu0
    %1015 = vst [vmem:[%s8] sm:$0xff] %v1013
    // Predicated region
    $region46: #{mapping_forward.1} parent=1 // pred_check
      _
    $region47: #{mapping_forward.1} parent=1 // pred_check_branch
      %1017 = sbr.rel (0) target = $region49
    $region48: #{mapping_forward.1} parent=1 // pred_region
      _
    $region49: #{mapping_forward.1} parent=1 // pred_fallthru
      _
    // Predicated region
    $region50: #{mapping_forward.1} parent=1 // pred_check
      _
    $region51: #{mapping_forward.1} parent=1 // pred_check_branch
      %1019 = sbr.rel (0) target = $region53
    $region52: #{mapping_forward.1} parent=1 // pred_region
      _
    $region53: #{mapping_forward.1} parent=1 // pred_fallthru
      _
    %1020 = vsyncpa [#allocation3], 1
    %1021 = vsyncpa [#allocation5], 1

</llo_original>
